<compile_context>
chip_gen: v7x
topology: tpu7x:2x2x1
jax: 0.10.0
libtpu: 0.0.40
codegen_flags: <defaults>
</compile_context>

<pallas_src>
import functools

import jax
import jax.numpy as jnp
from jax import lax
from jax.experimental import pallas as pl
from jax.experimental.pallas import tpu as pltpu


# ------------------------------ small helpers --------------------------------
def _round_up(n, m):
    return ((n + m - 1) // m) * m


def _pad_to(a, axis, size):
    if a.shape[axis] == size:
        return a
    pads = [(0, 0)] * a.ndim
    pads[axis] = (0, size - a.shape[axis])
    return jnp.pad(a, pads)


def _pad_gate_cols(w, h, hp):
    """(..., 4h) -> (..., 4hp): pad each of the i,f,g,o gate blocks independently."""
    if h == hp:
        return w
    blocks = jnp.split(w, 4, axis=-1)
    return jnp.concatenate([_pad_to(b, -1, hp) for b in blocks], axis=-1)


def _sigmoid_tanh(z):
    # sigmoid(z) == 0.5*tanh(0.5*z) + 0.5 : one EUP op (tanh) instead of exp + divide.
    return 0.5 * jnp.tanh(0.5 * z) + 0.5


# ----------------------------- Pallas kernel ---------------------------------
def _fused_lstm_layer_kernel(x_ref, wih_ref, b_ref, whh_ref, y_ref,
                             gin_sc, h_sc, c_sc, *, hidden, chunk, unroll):
    """One LSTM layer for a (chunk, batch_block) tile, input projection fused.

    x_ref   : (chunk, bb, Hin)   layer input (time-major), f32
    wih_ref : (Hin, 4*hidden)    input-projection weights, bf16, gate-padded
    b_ref   : (1, 4*hidden)      b_ih + b_hh, f32, gate-padded
    whh_ref : (hidden, 4*hidden) recurrent weights, bf16, gate-padded
    y_ref   : (chunk, bb, hidden) hidden-state outputs, f32
    gin_sc  : (chunk, bb, 4*hidden) VMEM scratch holding the chunk's input gates
    h_sc/c_sc : (bb, hidden)     VMEM scratch carrying the recurrence across chunks
    """
    # Reset recurrent state at the start of each batch-block's time sweep.
    @pl.when(pl.program_id(1) == 0)
    def _():
        h_sc[...] = jnp.zeros_like(h_sc)
        c_sc[...] = jnp.zeros_like(c_sc)

    _, bb, hin = x_ref.shape

    # Fused input projection for the WHOLE chunk: one bf16 MXU matmul, M = chunk*bb,
    # f32 accumulation.  (Reshape only collapses leading dims -> layout no-op since
    # bb is a multiple of 8.)
    x2d = x_ref[...].reshape(chunk * bb, hin).astype(jnp.bfloat16)
    gin = jnp.dot(x2d, wih_ref[...], preferred_element_type=jnp.float32) + b_ref[...]
    gin_sc[...] = gin.reshape(chunk, bb, 4 * hidden)

    whh = whh_ref[...]                      # bf16, hoisted: loaded once per chunk

    def step(tt, carry):
        h, c = carry
        gates = gin_sc[tt] + jnp.dot(h.astype(jnp.bfloat16), whh,
                                     preferred_element_type=jnp.float32)
        i = _sigmoid_tanh(gates[:, 0 * hidden:1 * hidden])
        f = _sigmoid_tanh(gates[:, 1 * hidden:2 * hidden])
        g = jnp.tanh(gates[:, 2 * hidden:3 * hidden])
        o = _sigmoid_tanh(gates[:, 3 * hidden:4 * hidden])
        c_new = f * c + i * g
        h_new = o * jnp.tanh(c_new)
        y_ref[tt] = h_new.astype(y_ref.dtype)
        return h_new, c_new

    h, c = lax.fori_loop(0, chunk, step, (h_sc[...], c_sc[...]), unroll=unroll)
    h_sc[...] = h
    c_sc[...] = c


def _layer_vmem_bytes(chunk, bb, hp):
    """Rough VMEM budget for one layer's pallas_call (used to set vmem_limit_bytes)."""
    f32, bf16 = 4, 2
    return (2 * chunk * bb * hp * f32          # input x, double-buffered
            + 2 * chunk * bb * hp * f32        # output y, double-buffered
            + hp * 4 * hp * bf16               # wih, single-buffered
            + hp * 4 * hp * bf16               # whh, single-buffered
            + 8 * 4 * hp * f32                 # bias (sublane-padded)
            + chunk * bb * 4 * hp * f32        # gin scratch
            + 2 * bb * hp * f32)               # h, c scratch


def _run_fused_lstm_layer(x_tm, wih_p, b_p, whh_p, hp, *, chunk, batch_block, vmem_limit):
    """x_tm: (Tp, Bp, Hp) time-major layer input -> y: (Tp, Bp, Hp) time-major."""
    tp, bp, hin = x_tm.shape
    nb, nt = bp // batch_block, tp // chunk

    kernel = functools.partial(_fused_lstm_layer_kernel, hidden=hp, chunk=chunk,
                               unroll=min(8, chunk))
    return pl.pallas_call(
        kernel,
        out_shape=jax.ShapeDtypeStruct((tp, bp, hp), jnp.float32),
        grid_spec=pltpu.PrefetchScalarGridSpec(
            num_scalar_prefetch=0,
            grid=(nb, nt),                                    # (batch blocks, time chunks)
            in_specs=[
                pl.BlockSpec((chunk, batch_block, hin), lambda b, t: (t, b, 0)),
                # Constant index_map -> DMA'd once; single-buffer to halve weight VMEM.
                pl.BlockSpec((hin, 4 * hp), lambda b, t: (0, 0),
                             pipeline_mode=pl.Buffered(1)),
                pl.BlockSpec((1, 4 * hp), lambda b, t: (0, 0),
                             pipeline_mode=pl.Buffered(1)),
                pl.BlockSpec((hp, 4 * hp), lambda b, t: (0, 0),
                             pipeline_mode=pl.Buffered(1)),
            ],
            out_specs=pl.BlockSpec((chunk, batch_block, hp), lambda b, t: (t, b, 0)),
            scratch_shapes=[
                pltpu.VMEM((chunk, batch_block, 4 * hp), jnp.float32),   # gin chunk
                pltpu.VMEM((batch_block, hp), jnp.float32),              # h carry
                pltpu.VMEM((batch_block, hp), jnp.float32),              # c carry
            ],
        ),
        compiler_params=pltpu.CompilerParams(
            # time MUST stay sequential (recurrence carry); batch blocks are independent.
            dimension_semantics=("parallel", "arbitrary"),
            vmem_limit_bytes=vmem_limit),
    )(x_tm, wih_p, b_p, whh_p)


# ------------------------------- forward pass --------------------------------
def encoder_forward(x, params, *, time_chunk=32, batch_block=None, training=False):
    """x: (B, T, input_size) f32 -> y: (B, T, encoding_size) f32 (batch_first)."""
    if training:
        # TODO(synk): training-mode stochastic dropout (p=0.3) not implemented.
        raise NotImplementedError("Encoder Pallas kernel is inference-only (dropout=identity).")

    B, T, _ = x.shape
    H = params["we"].shape[1]
    Hp = _round_up(H, 128)                     # lane-aligned hidden size
    Bp = _round_up(B, 8)                       # sublane-aligned batch
    tc = max(1, min(int(time_chunk), _round_up(T, 8)))
    Tp = _round_up(T, tc)
    if batch_block is None:
        # >= 2 batch blocks when batch allows, so v7x's 2 TensorCores both get work.
        bb = Bp // 2 if Bp >= 16 else Bp
    else:
        bb = int(batch_block)
    assert bb % 8 == 0 and Bp % bb == 0, "batch_block must be a multiple of 8 dividing padded batch"

    # Pad activations with zeros; padded rows / steps / hidden units are dropped at the end.
    x_p = _pad_to(_pad_to(x, 0, Bp), 1, Tp)                            # (Bp, Tp, D)

    # Pad weights so each gate block (i,f,g,o) is lane-aligned at width Hp; matmul weights
    # are cast to bf16 once here (in-kernel accumulation stays f32).
    # (In production these would be pre-padded/cast once outside the forward.)
    we_p   = _pad_to(params["we"], 1, Hp)                                              # (D, Hp)
    be_p   = _pad_to(params["be"], 1, Hp)                                              # (1, Hp)
    wih0_p = _pad_to(_pad_gate_cols(params["wih0"], H, Hp), 0, Hp).astype(jnp.bfloat16)  # (Hp, 4Hp)
    whh0_p = _pad_to(_pad_gate_cols(params["whh0"], H, Hp), 0, Hp).astype(jnp.bfloat16)  # (Hp, 4Hp)
    b0_p   = _pad_gate_cols(params["b0"], H, Hp)                                         # (1, 4Hp) f32
    wih1_p = _pad_to(_pad_gate_cols(params["wih1"], H, Hp), 0, Hp).astype(jnp.bfloat16)  # (Hp, 4Hp)
    whh1_p = _pad_to(_pad_gate_cols(params["whh1"], H, Hp), 0, Hp).astype(jnp.bfloat16)  # (Hp, 4Hp)
    b1_p   = _pad_gate_cols(params["b1"], H, Hp)                                         # (1, 4Hp) f32

    # Dropout = identity (inference).  Embed Linear hoisted out as a single sequence-wide
    # matmul (M = Bp*Tp); the (B,T,D)->(T,B,.) transpose is folded into its output layout.
    e = jnp.einsum("btd,dh->tbh", x_p, we_p) + be_p[0]                 # (Tp, Bp, Hp)

    vmem_limit = min(max(32 << 20, int(_layer_vmem_bytes(tc, bb, Hp) * 1.5) + (2 << 20)),
                     100 << 20)

    y0 = _run_fused_lstm_layer(e, wih0_p, b0_p, whh0_p, Hp,
                               chunk=tc, batch_block=bb, vmem_limit=vmem_limit)
    y1 = _run_fused_lstm_layer(y0, wih1_p, b1_p, whh1_p, Hp,
                               chunk=tc, batch_block=bb, vmem_limit=vmem_limit)

    # Drop padding, back to batch_first (single XLA transpose of the final output).
    return jnp.transpose(y1[:T, :B, :H], (1, 0, 2))                    # (B, T, H)


# ---------------------------- pure-JAX reference -----------------------------
def encoder_ref(x, params):
    H = params["we"].shape[1]
    e = x @ params["we"] + params["be"][0]                             # (B, T, H)

    def run_layer(inp, wih, whh, b):
        B = inp.shape[0]

        def step(carry, x_t):
            h, c = carry
            gates = x_t @ wih + h @ whh + b[0]
            i = jax.nn.sigmoid(gates[:, 0 * H:1 * H])
            f = jax.nn.sigmoid(gates[:, 1 * H:2 * H])
            g = jnp.tanh(gates[:, 2 * H:3 * H])
            o = jax.nn.sigmoid(gates[:, 3 * H:4 * H])
            c = f * c + i * g
            h = o * jnp.tanh(c)
            return (h, c), h

        init = (jnp.zeros((B, H), jnp.float32), jnp.zeros((B, H), jnp.float32))
        _, ys = lax.scan(step, init, jnp.transpose(inp, (1, 0, 2)))
        return jnp.transpose(ys, (1, 0, 2))

    y0 = run_layer(e, params["wih0"], params["whh0"], params["b0"])
    y1 = run_layer(y0, params["wih1"], params["whh1"], params["b1"])
    return y1


# -------------------------------- parameters ---------------------------------
def init_params(key, input_size, encoding_size):
    H = encoding_size
    ks = jax.random.split(key, 10)
    u = lambda k, shape, bound: jax.random.uniform(
        k, shape, jnp.float32, minval=-bound, maxval=bound)
    be = 1.0 / jnp.sqrt(input_size)
    bl = 1.0 / jnp.sqrt(H)
    return {
        # embed Linear: stored transposed, (in, out)
        "we":   u(ks[0], (input_size, H), be),
        "be":   u(ks[1], (1, H), be),
        # LSTM layer 0 (input = H): W_ih^T (H,4H), W_hh^T (H,4H), b_ih + b_hh
        "wih0": u(ks[2], (H, 4 * H), bl),
        "whh0": u(ks[3], (H, 4 * H), bl),
        "b0":   u(ks[4], (1, 4 * H), bl) + u(ks[5], (1, 4 * H), bl),
        # LSTM layer 1
        "wih1": u(ks[6], (H, 4 * H), bl),
        "whh1": u(ks[7], (H, 4 * H), bl),
        "b1":   u(ks[8], (1, 4 * H), bl) + u(ks[9], (1, 4 * H), bl),
    }


# ----------------------------------- main -------------------------------------
if __name__ == "__main__":
    key = jax.random.PRNGKey(0)
    k_x, k_p = jax.random.split(key)

    B, T = 2, 8
    input_size, encoding_size = 4, 32

    x = jax.random.normal(k_x, (B, T, input_size), jnp.float32)
    params = init_params(k_p, input_size, encoding_size)

    fwd = jax.jit(encoder_forward)
    y = jax.block_until_ready(fwd(x, params))

    y_ref = encoder_ref(x, params)
    assert y.shape == (B, T, encoding_size)
    # bf16 MXU operands (f32 accumulation) vs pure-f32 reference -> bf16-level tolerance.
    err = float(jnp.max(jnp.abs(y - y_ref)))
    assert err < 3e-2, f"mismatch vs reference: max abs err = {err}"

    print("KERNEL_OK")
</pallas_src>

<mosaic_0001>
module attributes {stable_mosaic.version = 11 : i64} {
  func.func @_fused_lstm_layer_kernel(%arg0: i32, %arg1: i32, %arg2: memref<8x8x128xf32, #tpu.memory_space<vmem>>, %arg3: memref<128x512xbf16, #tpu.memory_space<vmem>>, %arg4: memref<1x512xf32, #tpu.memory_space<vmem>>, %arg5: memref<128x512xbf16, #tpu.memory_space<vmem>>, %arg6: memref<8x8x128xf32, #tpu.memory_space<vmem>>, %arg7: memref<8x8x512xf32, #tpu.memory_space<vmem>>, %arg8: memref<8x128xf32, #tpu.memory_space<vmem>>, %arg9: memref<8x128xf32, #tpu.memory_space<vmem>>) attributes {dimension_semantics = [#tpu.dimension_semantics<parallel>, #tpu.dimension_semantics<arbitrary>], iteration_bounds = array<i64: 1, 1>, scalar_prefetch = 0 : i64, scratch_operands = 3 : i64, tpu.core_type = #tpu.core_type<tc>, window_params = [{transform_indices = @transform_0, window_bounds = array<i64: 8, 8, 128>}, {pipeline_mode = #tpu.pipeline_mode<synchronous>, transform_indices = @transform_1, window_bounds = array<i64: 128, 512>}, {pipeline_mode = #tpu.pipeline_mode<synchronous>, transform_indices = @transform_2, window_bounds = array<i64: 1, 512>}, {pipeline_mode = #tpu.pipeline_mode<synchronous>, transform_indices = @transform_3, window_bounds = array<i64: 128, 512>}, {transform_indices = @transform_4, window_bounds = array<i64: 8, 8, 128>}]} {
    %c0_i32 = arith.constant 0 : i32
    %0 = arith.cmpi eq, %arg1, %c0_i32 : i32
    %1 = arith.extui %0 : i1 to i32
    %c0_i32_0 = arith.constant 0 : i32
    %2 = arith.cmpi ne, %1, %c0_i32_0 : i32
    scf.if %2 {
      %cst_133 = arith.constant 0.000000e+00 : f32
      %346 = vector.broadcast %cst_133 : f32 to vector<8x128xf32>
      %c0_134 = arith.constant 0 : index
      %c0_135 = arith.constant 0 : index
      %347 = vector.load %arg8[%c0_134, %c0_135] : memref<8x128xf32, #tpu.memory_space<vmem>>, vector<8x128xf32>
      tpu.vector_store %arg8[%c0_134, %c0_135], %346 {strides = array<i32>} : memref<8x128xf32, #tpu.memory_space<vmem>>, vector<8x128xf32>,
      %cst_136 = arith.constant 0.000000e+00 : f32
      %348 = vector.broadcast %cst_136 : f32 to vector<8x128xf32>
      %c0_137 = arith.constant 0 : index
      %c0_138 = arith.constant 0 : index
      %349 = vector.load %arg9[%c0_137, %c0_138] : memref<8x128xf32, #tpu.memory_space<vmem>>, vector<8x128xf32>
      tpu.vector_store %arg9[%c0_137, %c0_138], %348 {strides = array<i32>} : memref<8x128xf32, #tpu.memory_space<vmem>>, vector<8x128xf32>,
    } else {
    }
    %c0 = arith.constant 0 : index
    %c0_1 = arith.constant 0 : index
    %c0_2 = arith.constant 0 : index
    %3 = vector.load %arg2[%c0, %c0_1, %c0_2] : memref<8x8x128xf32, #tpu.memory_space<vmem>>, vector<8x8x128xf32>
    %4 = vector.shape_cast %3 : vector<8x8x128xf32> to vector<64x128xf32>
    %5 = arith.truncf %4 : vector<64x128xf32> to vector<64x128xbf16>
    %c0_3 = arith.constant 0 : index
    %c0_4 = arith.constant 0 : index
    %6 = vector.load %arg3[%c0_3, %c0_4] : memref<128x512xbf16, #tpu.memory_space<vmem>>, vector<128x512xbf16>
    %cst = arith.constant dense<0.000000e+00> : vector<64x512xf32>
    %7 = tpu.matmul %5, %6, %cst {dimension_numbers = #tpu.dot_dimension_numbers<[1], [0], [0], [1], [0, 0, 1, 1], [], []>} : vector<64x128xbf16>, vector<128x512xbf16>, vector<64x512xf32> -> vector<64x512xf32>
    %c0_5 = arith.constant 0 : index
    %c0_6 = arith.constant 0 : index
    %8 = vector.load %arg4[%c0_5, %c0_6] : memref<1x512xf32, #tpu.memory_space<vmem>>, vector<1x512xf32>
    %9 = vector.broadcast %8 : vector<1x512xf32> to vector<64x512xf32>
    %10 = arith.addf %7, %9 : vector<64x512xf32>
    %11 = vector.shape_cast %10 : vector<64x512xf32> to vector<8x8x512xf32>
    %c0_7 = arith.constant 0 : index
    %c0_8 = arith.constant 0 : index
    %c0_9 = arith.constant 0 : index
    %12 = vector.load %arg7[%c0_7, %c0_8, %c0_9] : memref<8x8x512xf32, #tpu.memory_space<vmem>>, vector<8x8x512xf32>
    tpu.vector_store %arg7[%c0_7, %c0_8, %c0_9], %11 {strides = array<i32>} : memref<8x8x512xf32, #tpu.memory_space<vmem>>, vector<8x8x512xf32>,
    %c0_10 = arith.constant 0 : index
    %c0_11 = arith.constant 0 : index
    %13 = vector.load %arg5[%c0_10, %c0_11] : memref<128x512xbf16, #tpu.memory_space<vmem>>, vector<128x512xbf16>
    %c0_12 = arith.constant 0 : index
    %c0_13 = arith.constant 0 : index
    %14 = vector.load %arg8[%c0_12, %c0_13] : memref<8x128xf32, #tpu.memory_space<vmem>>, vector<8x128xf32>
    %c0_14 = arith.constant 0 : index
    %c0_15 = arith.constant 0 : index
    %15 = vector.load %arg9[%c0_14, %c0_15] : memref<8x128xf32, #tpu.memory_space<vmem>>, vector<8x128xf32>
    %c0_i32_16 = arith.constant 0 : i32
    %16 = arith.index_cast %c0_i32_16 : i32 to index
    %c0_17 = arith.constant 0 : index
    %c0_18 = arith.constant 0 : index
    %17 = vector.load %arg7[%16, %c0_17, %c0_18] : memref<8x8x512xf32, #tpu.memory_space<vmem>>, vector<1x8x512xf32>
    %18 = vector.shape_cast %17 : vector<1x8x512xf32> to vector<8x512xf32>
    %19 = arith.truncf %14 : vector<8x128xf32> to vector<8x128xbf16>
    %cst_19 = arith.constant dense<0.000000e+00> : vector<8x512xf32>
    %20 = tpu.matmul %19, %13, %cst_19 {dimension_numbers = #tpu.dot_dimension_numbers<[1], [0], [0], [1], [0, 0, 1, 1], [], []>} : vector<8x128xbf16>, vector<128x512xbf16>, vector<8x512xf32> -> vector<8x512xf32>
    %21 = arith.addf %18, %20 : vector<8x512xf32>
    %22 = vector.extract_strided_slice %21 {offsets = [0, 0], sizes = [8, 128], strides = [1, 1]} : vector<8x512xf32> to vector<8x128xf32>
    %cst_20 = arith.constant 5.000000e-01 : f32
    %23 = vector.broadcast %cst_20 : f32 to vector<8x128xf32>
    %24 = arith.mulf %23, %22 : vector<8x128xf32>
    %25 = math.tanh %24 : vector<8x128xf32>
    %cst_21 = arith.constant 5.000000e-01 : f32
    %26 = vector.broadcast %cst_21 : f32 to vector<8x128xf32>
    %27 = arith.mulf %26, %25 : vector<8x128xf32>
    %cst_22 = arith.constant 5.000000e-01 : f32
    %28 = vector.broadcast %cst_22 : f32 to vector<8x128xf32>
    %29 = arith.addf %27, %28 : vector<8x128xf32>
    %30 = vector.extract_strided_slice %21 {offsets = [0, 128], sizes = [8, 128], strides = [1, 1]} : vector<8x512xf32> to vector<8x128xf32>
    %cst_23 = arith.constant 5.000000e-01 : f32
    %31 = vector.broadcast %cst_23 : f32 to vector<8x128xf32>
    %32 = arith.mulf %31, %30 : vector<8x128xf32>
    %33 = math.tanh %32 : vector<8x128xf32>
    %cst_24 = arith.constant 5.000000e-01 : f32
    %34 = vector.broadcast %cst_24 : f32 to vector<8x128xf32>
    %35 = arith.mulf %34, %33 : vector<8x128xf32>
    %cst_25 = arith.constant 5.000000e-01 : f32
    %36 = vector.broadcast %cst_25 : f32 to vector<8x128xf32>
    %37 = arith.addf %35, %36 : vector<8x128xf32>
    %38 = vector.extract_strided_slice %21 {offsets = [0, 256], sizes = [8, 128], strides = [1, 1]} : vector<8x512xf32> to vector<8x128xf32>
    %39 = math.tanh %38 : vector<8x128xf32>
    %40 = vector.extract_strided_slice %21 {offsets = [0, 384], sizes = [8, 128], strides = [1, 1]} : vector<8x512xf32> to vector<8x128xf32>
    %cst_26 = arith.constant 5.000000e-01 : f32
    %41 = vector.broadcast %cst_26 : f32 to vector<8x128xf32>
    %42 = arith.mulf %41, %40 : vector<8x128xf32>
    %43 = math.tanh %42 : vector<8x128xf32>
    %cst_27 = arith.constant 5.000000e-01 : f32
    %44 = vector.broadcast %cst_27 : f32 to vector<8x128xf32>
    %45 = arith.mulf %44, %43 : vector<8x128xf32>
    %cst_28 = arith.constant 5.000000e-01 : f32
    %46 = vector.broadcast %cst_28 : f32 to vector<8x128xf32>
    %47 = arith.addf %45, %46 : vector<8x128xf32>
    %48 = arith.mulf %37, %15 : vector<8x128xf32>
    %49 = arith.mulf %29, %39 : vector<8x128xf32>
    %50 = arith.addf %48, %49 : vector<8x128xf32>
    %51 = math.tanh %50 : vector<8x128xf32>
    %52 = arith.mulf %47, %51 : vector<8x128xf32>
    %53 = arith.index_cast %c0_i32_16 : i32 to index
    %c0_29 = arith.constant 0 : index
    %c0_30 = arith.constant 0 : index
    %54 = vector.load %arg6[%53, %c0_29, %c0_30] : memref<8x8x128xf32, #tpu.memory_space<vmem>>, vector<1x8x128xf32>
    %55 = vector.shape_cast %54 : vector<1x8x128xf32> to vector<8x128xf32>
    %56 = vector.shape_cast %52 : vector<8x128xf32> to vector<1x8x128xf32>
    tpu.vector_store %arg6[%53, %c0_29, %c0_30], %56 {strides = array<i32>} : memref<8x8x128xf32, #tpu.memory_space<vmem>>, vector<1x8x128xf32>,
    %c1_i32 = arith.constant 1 : i32
    %57 = arith.index_cast %c1_i32 : i32 to index
    %c0_31 = arith.constant 0 : index
    %c0_32 = arith.constant 0 : index
    %58 = vector.load %arg7[%57, %c0_31, %c0_32] : memref<8x8x512xf32, #tpu.memory_space<vmem>>, vector<1x8x512xf32>
    %59 = vector.shape_cast %58 : vector<1x8x512xf32> to vector<8x512xf32>
    %60 = arith.truncf %52 : vector<8x128xf32> to vector<8x128xbf16>
    %cst_33 = arith.constant dense<0.000000e+00> : vector<8x512xf32>
    %61 = tpu.matmul %60, %13, %cst_33 {dimension_numbers = #tpu.dot_dimension_numbers<[1], [0], [0], [1], [0, 0, 1, 1], [], []>} : vector<8x128xbf16>, vector<128x512xbf16>, vector<8x512xf32> -> vector<8x512xf32>
    %62 = arith.addf %59, %61 : vector<8x512xf32>
    %63 = vector.extract_strided_slice %62 {offsets = [0, 0], sizes = [8, 128], strides = [1, 1]} : vector<8x512xf32> to vector<8x128xf32>
    %cst_34 = arith.constant 5.000000e-01 : f32
    %64 = vector.broadcast %cst_34 : f32 to vector<8x128xf32>
    %65 = arith.mulf %64, %63 : vector<8x128xf32>
    %66 = math.tanh %65 : vector<8x128xf32>
    %cst_35 = arith.constant 5.000000e-01 : f32
    %67 = vector.broadcast %cst_35 : f32 to vector<8x128xf32>
    %68 = arith.mulf %67, %66 : vector<8x128xf32>
    %cst_36 = arith.constant 5.000000e-01 : f32
    %69 = vector.broadcast %cst_36 : f32 to vector<8x128xf32>
    %70 = arith.addf %68, %69 : vector<8x128xf32>
    %71 = vector.extract_strided_slice %62 {offsets = [0, 128], sizes = [8, 128], strides = [1, 1]} : vector<8x512xf32> to vector<8x128xf32>
    %cst_37 = arith.constant 5.000000e-01 : f32
    %72 = vector.broadcast %cst_37 : f32 to vector<8x128xf32>
    %73 = arith.mulf %72, %71 : vector<8x128xf32>
    %74 = math.tanh %73 : vector<8x128xf32>
    %cst_38 = arith.constant 5.000000e-01 : f32
    %75 = vector.broadcast %cst_38 : f32 to vector<8x128xf32>
    %76 = arith.mulf %75, %74 : vector<8x128xf32>
    %cst_39 = arith.constant 5.000000e-01 : f32
    %77 = vector.broadcast %cst_39 : f32 to vector<8x128xf32>
    %78 = arith.addf %76, %77 : vector<8x128xf32>
    %79 = vector.extract_strided_slice %62 {offsets = [0, 256], sizes = [8, 128], strides = [1, 1]} : vector<8x512xf32> to vector<8x128xf32>
    %80 = math.tanh %79 : vector<8x128xf32>
    %81 = vector.extract_strided_slice %62 {offsets = [0, 384], sizes = [8, 128], strides = [1, 1]} : vector<8x512xf32> to vector<8x128xf32>
    %cst_40 = arith.constant 5.000000e-01 : f32
    %82 = vector.broadcast %cst_40 : f32 to vector<8x128xf32>
    %83 = arith.mulf %82, %81 : vector<8x128xf32>
    %84 = math.tanh %83 : vector<8x128xf32>
    %cst_41 = arith.constant 5.000000e-01 : f32
    %85 = vector.broadcast %cst_41 : f32 to vector<8x128xf32>
    %86 = arith.mulf %85, %84 : vector<8x128xf32>
    %cst_42 = arith.constant 5.000000e-01 : f32
    %87 = vector.broadcast %cst_42 : f32 to vector<8x128xf32>
    %88 = arith.addf %86, %87 : vector<8x128xf32>
    %89 = arith.mulf %78, %50 : vector<8x128xf32>
    %90 = arith.mulf %70, %80 : vector<8x128xf32>
    %91 = arith.addf %89, %90 : vector<8x128xf32>
    %92 = math.tanh %91 : vector<8x128xf32>
    %93 = arith.mulf %88, %92 : vector<8x128xf32>
    %94 = arith.index_cast %c1_i32 : i32 to index
    %c0_43 = arith.constant 0 : index
    %c0_44 = arith.constant 0 : index
    %95 = vector.load %arg6[%94, %c0_43, %c0_44] : memref<8x8x128xf32, #tpu.memory_space<vmem>>, vector<1x8x128xf32>
    %96 = vector.shape_cast %95 : vector<1x8x128xf32> to vector<8x128xf32>
    %97 = vector.shape_cast %93 : vector<8x128xf32> to vector<1x8x128xf32>
    tpu.vector_store %arg6[%94, %c0_43, %c0_44], %97 {strides = array<i32>} : memref<8x8x128xf32, #tpu.memory_space<vmem>>, vector<1x8x128xf32>,
    %c2_i32 = arith.constant 2 : i32
    %98 = arith.index_cast %c2_i32 : i32 to index
    %c0_45 = arith.constant 0 : index
    %c0_46 = arith.constant 0 : index
    %99 = vector.load %arg7[%98, %c0_45, %c0_46] : memref<8x8x512xf32, #tpu.memory_space<vmem>>, vector<1x8x512xf32>
    %100 = vector.shape_cast %99 : vector<1x8x512xf32> to vector<8x512xf32>
    %101 = arith.truncf %93 : vector<8x128xf32> to vector<8x128xbf16>
    %cst_47 = arith.constant dense<0.000000e+00> : vector<8x512xf32>
    %102 = tpu.matmul %101, %13, %cst_47 {dimension_numbers = #tpu.dot_dimension_numbers<[1], [0], [0], [1], [0, 0, 1, 1], [], []>} : vector<8x128xbf16>, vector<128x512xbf16>, vector<8x512xf32> -> vector<8x512xf32>
    %103 = arith.addf %100, %102 : vector<8x512xf32>
    %104 = vector.extract_strided_slice %103 {offsets = [0, 0], sizes = [8, 128], strides = [1, 1]} : vector<8x512xf32> to vector<8x128xf32>
    %cst_48 = arith.constant 5.000000e-01 : f32
    %105 = vector.broadcast %cst_48 : f32 to vector<8x128xf32>
    %106 = arith.mulf %105, %104 : vector<8x128xf32>
    %107 = math.tanh %106 : vector<8x128xf32>
    %cst_49 = arith.constant 5.000000e-01 : f32
    %108 = vector.broadcast %cst_49 : f32 to vector<8x128xf32>
    %109 = arith.mulf %108, %107 : vector<8x128xf32>
    %cst_50 = arith.constant 5.000000e-01 : f32
    %110 = vector.broadcast %cst_50 : f32 to vector<8x128xf32>
    %111 = arith.addf %109, %110 : vector<8x128xf32>
    %112 = vector.extract_strided_slice %103 {offsets = [0, 128], sizes = [8, 128], strides = [1, 1]} : vector<8x512xf32> to vector<8x128xf32>
    %cst_51 = arith.constant 5.000000e-01 : f32
    %113 = vector.broadcast %cst_51 : f32 to vector<8x128xf32>
    %114 = arith.mulf %113, %112 : vector<8x128xf32>
    %115 = math.tanh %114 : vector<8x128xf32>
    %cst_52 = arith.constant 5.000000e-01 : f32
    %116 = vector.broadcast %cst_52 : f32 to vector<8x128xf32>
    %117 = arith.mulf %116, %115 : vector<8x128xf32>
    %cst_53 = arith.constant 5.000000e-01 : f32
    %118 = vector.broadcast %cst_53 : f32 to vector<8x128xf32>
    %119 = arith.addf %117, %118 : vector<8x128xf32>
    %120 = vector.extract_strided_slice %103 {offsets = [0, 256], sizes = [8, 128], strides = [1, 1]} : vector<8x512xf32> to vector<8x128xf32>
    %121 = math.tanh %120 : vector<8x128xf32>
    %122 = vector.extract_strided_slice %103 {offsets = [0, 384], sizes = [8, 128], strides = [1, 1]} : vector<8x512xf32> to vector<8x128xf32>
    %cst_54 = arith.constant 5.000000e-01 : f32
    %123 = vector.broadcast %cst_54 : f32 to vector<8x128xf32>
    %124 = arith.mulf %123, %122 : vector<8x128xf32>
    %125 = math.tanh %124 : vector<8x128xf32>
    %cst_55 = arith.constant 5.000000e-01 : f32
    %126 = vector.broadcast %cst_55 : f32 to vector<8x128xf32>
    %127 = arith.mulf %126, %125 : vector<8x128xf32>
    %cst_56 = arith.constant 5.000000e-01 : f32
    %128 = vector.broadcast %cst_56 : f32 to vector<8x128xf32>
    %129 = arith.addf %127, %128 : vector<8x128xf32>
    %130 = arith.mulf %119, %91 : vector<8x128xf32>
    %131 = arith.mulf %111, %121 : vector<8x128xf32>
    %132 = arith.addf %130, %131 : vector<8x128xf32>
    %133 = math.tanh %132 : vector<8x128xf32>
    %134 = arith.mulf %129, %133 : vector<8x128xf32>
    %135 = arith.index_cast %c2_i32 : i32 to index
    %c0_57 = arith.constant 0 : index
    %c0_58 = arith.constant 0 : index
    %136 = vector.load %arg6[%135, %c0_57, %c0_58] : memref<8x8x128xf32, #tpu.memory_space<vmem>>, vector<1x8x128xf32>
    %137 = vector.shape_cast %136 : vector<1x8x128xf32> to vector<8x128xf32>
    %138 = vector.shape_cast %134 : vector<8x128xf32> to vector<1x8x128xf32>
    tpu.vector_store %arg6[%135, %c0_57, %c0_58], %138 {strides = array<i32>} : memref<8x8x128xf32, #tpu.memory_space<vmem>>, vector<1x8x128xf32>,
    %c3_i32 = arith.constant 3 : i32
    %139 = arith.index_cast %c3_i32 : i32 to index
    %c0_59 = arith.constant 0 : index
    %c0_60 = arith.constant 0 : index
    %140 = vector.load %arg7[%139, %c0_59, %c0_60] : memref<8x8x512xf32, #tpu.memory_space<vmem>>, vector<1x8x512xf32>
    %141 = vector.shape_cast %140 : vector<1x8x512xf32> to vector<8x512xf32>
    %142 = arith.truncf %134 : vector<8x128xf32> to vector<8x128xbf16>
    %cst_61 = arith.constant dense<0.000000e+00> : vector<8x512xf32>
    %143 = tpu.matmul %142, %13, %cst_61 {dimension_numbers = #tpu.dot_dimension_numbers<[1], [0], [0], [1], [0, 0, 1, 1], [], []>} : vector<8x128xbf16>, vector<128x512xbf16>, vector<8x512xf32> -> vector<8x512xf32>
    %144 = arith.addf %141, %143 : vector<8x512xf32>
    %145 = vector.extract_strided_slice %144 {offsets = [0, 0], sizes = [8, 128], strides = [1, 1]} : vector<8x512xf32> to vector<8x128xf32>
    %cst_62 = arith.constant 5.000000e-01 : f32
    %146 = vector.broadcast %cst_62 : f32 to vector<8x128xf32>
    %147 = arith.mulf %146, %145 : vector<8x128xf32>
    %148 = math.tanh %147 : vector<8x128xf32>
    %cst_63 = arith.constant 5.000000e-01 : f32
    %149 = vector.broadcast %cst_63 : f32 to vector<8x128xf32>
    %150 = arith.mulf %149, %148 : vector<8x128xf32>
    %cst_64 = arith.constant 5.000000e-01 : f32
    %151 = vector.broadcast %cst_64 : f32 to vector<8x128xf32>
    %152 = arith.addf %150, %151 : vector<8x128xf32>
    %153 = vector.extract_strided_slice %144 {offsets = [0, 128], sizes = [8, 128], strides = [1, 1]} : vector<8x512xf32> to vector<8x128xf32>
    %cst_65 = arith.constant 5.000000e-01 : f32
    %154 = vector.broadcast %cst_65 : f32 to vector<8x128xf32>
    %155 = arith.mulf %154, %153 : vector<8x128xf32>
    %156 = math.tanh %155 : vector<8x128xf32>
    %cst_66 = arith.constant 5.000000e-01 : f32
    %157 = vector.broadcast %cst_66 : f32 to vector<8x128xf32>
    %158 = arith.mulf %157, %156 : vector<8x128xf32>
    %cst_67 = arith.constant 5.000000e-01 : f32
    %159 = vector.broadcast %cst_67 : f32 to vector<8x128xf32>
    %160 = arith.addf %158, %159 : vector<8x128xf32>
    %161 = vector.extract_strided_slice %144 {offsets = [0, 256], sizes = [8, 128], strides = [1, 1]} : vector<8x512xf32> to vector<8x128xf32>
    %162 = math.tanh %161 : vector<8x128xf32>
    %163 = vector.extract_strided_slice %144 {offsets = [0, 384], sizes = [8, 128], strides = [1, 1]} : vector<8x512xf32> to vector<8x128xf32>
    %cst_68 = arith.constant 5.000000e-01 : f32
    %164 = vector.broadcast %cst_68 : f32 to vector<8x128xf32>
    %165 = arith.mulf %164, %163 : vector<8x128xf32>
    %166 = math.tanh %165 : vector<8x128xf32>
    %cst_69 = arith.constant 5.000000e-01 : f32
    %167 = vector.broadcast %cst_69 : f32 to vector<8x128xf32>
    %168 = arith.mulf %167, %166 : vector<8x128xf32>
    %cst_70 = arith.constant 5.000000e-01 : f32
    %169 = vector.broadcast %cst_70 : f32 to vector<8x128xf32>
    %170 = arith.addf %168, %169 : vector<8x128xf32>
    %171 = arith.mulf %160, %132 : vector<8x128xf32>
    %172 = arith.mulf %152, %162 : vector<8x128xf32>
    %173 = arith.addf %171, %172 : vector<8x128xf32>
    %174 = math.tanh %173 : vector<8x128xf32>
    %175 = arith.mulf %170, %174 : vector<8x128xf32>
    %176 = arith.index_cast %c3_i32 : i32 to index
    %c0_71 = arith.constant 0 : index
    %c0_72 = arith.constant 0 : index
    %177 = vector.load %arg6[%176, %c0_71, %c0_72] : memref<8x8x128xf32, #tpu.memory_space<vmem>>, vector<1x8x128xf32>
    %178 = vector.shape_cast %177 : vector<1x8x128xf32> to vector<8x128xf32>
    %179 = vector.shape_cast %175 : vector<8x128xf32> to vector<1x8x128xf32>
    tpu.vector_store %arg6[%176, %c0_71, %c0_72], %179 {strides = array<i32>} : memref<8x8x128xf32, #tpu.memory_space<vmem>>, vector<1x8x128xf32>,
    %c4_i32 = arith.constant 4 : i32
    %180 = arith.index_cast %c4_i32 : i32 to index
    %c0_73 = arith.constant 0 : index
    %c0_74 = arith.constant 0 : index
    %181 = vector.load %arg7[%180, %c0_73, %c0_74] : memref<8x8x512xf32, #tpu.memory_space<vmem>>, vector<1x8x512xf32>
    %182 = vector.shape_cast %181 : vector<1x8x512xf32> to vector<8x512xf32>
    %183 = arith.truncf %175 : vector<8x128xf32> to vector<8x128xbf16>
    %cst_75 = arith.constant dense<0.000000e+00> : vector<8x512xf32>
    %184 = tpu.matmul %183, %13, %cst_75 {dimension_numbers = #tpu.dot_dimension_numbers<[1], [0], [0], [1], [0, 0, 1, 1], [], []>} : vector<8x128xbf16>, vector<128x512xbf16>, vector<8x512xf32> -> vector<8x512xf32>
    %185 = arith.addf %182, %184 : vector<8x512xf32>
    %186 = vector.extract_strided_slice %185 {offsets = [0, 0], sizes = [8, 128], strides = [1, 1]} : vector<8x512xf32> to vector<8x128xf32>
    %cst_76 = arith.constant 5.000000e-01 : f32
    %187 = vector.broadcast %cst_76 : f32 to vector<8x128xf32>
    %188 = arith.mulf %187, %186 : vector<8x128xf32>
    %189 = math.tanh %188 : vector<8x128xf32>
    %cst_77 = arith.constant 5.000000e-01 : f32
    %190 = vector.broadcast %cst_77 : f32 to vector<8x128xf32>
    %191 = arith.mulf %190, %189 : vector<8x128xf32>
    %cst_78 = arith.constant 5.000000e-01 : f32
    %192 = vector.broadcast %cst_78 : f32 to vector<8x128xf32>
    %193 = arith.addf %191, %192 : vector<8x128xf32>
    %194 = vector.extract_strided_slice %185 {offsets = [0, 128], sizes = [8, 128], strides = [1, 1]} : vector<8x512xf32> to vector<8x128xf32>
    %cst_79 = arith.constant 5.000000e-01 : f32
    %195 = vector.broadcast %cst_79 : f32 to vector<8x128xf32>
    %196 = arith.mulf %195, %194 : vector<8x128xf32>
    %197 = math.tanh %196 : vector<8x128xf32>
    %cst_80 = arith.constant 5.000000e-01 : f32
    %198 = vector.broadcast %cst_80 : f32 to vector<8x128xf32>
    %199 = arith.mulf %198, %197 : vector<8x128xf32>
    %cst_81 = arith.constant 5.000000e-01 : f32
    %200 = vector.broadcast %cst_81 : f32 to vector<8x128xf32>
    %201 = arith.addf %199, %200 : vector<8x128xf32>
    %202 = vector.extract_strided_slice %185 {offsets = [0, 256], sizes = [8, 128], strides = [1, 1]} : vector<8x512xf32> to vector<8x128xf32>
    %203 = math.tanh %202 : vector<8x128xf32>
    %204 = vector.extract_strided_slice %185 {offsets = [0, 384], sizes = [8, 128], strides = [1, 1]} : vector<8x512xf32> to vector<8x128xf32>
    %cst_82 = arith.constant 5.000000e-01 : f32
    %205 = vector.broadcast %cst_82 : f32 to vector<8x128xf32>
    %206 = arith.mulf %205, %204 : vector<8x128xf32>
    %207 = math.tanh %206 : vector<8x128xf32>
    %cst_83 = arith.constant 5.000000e-01 : f32
    %208 = vector.broadcast %cst_83 : f32 to vector<8x128xf32>
    %209 = arith.mulf %208, %207 : vector<8x128xf32>
    %cst_84 = arith.constant 5.000000e-01 : f32
    %210 = vector.broadcast %cst_84 : f32 to vector<8x128xf32>
    %211 = arith.addf %209, %210 : vector<8x128xf32>
    %212 = arith.mulf %201, %173 : vector<8x128xf32>
    %213 = arith.mulf %193, %203 : vector<8x128xf32>
    %214 = arith.addf %212, %213 : vector<8x128xf32>
    %215 = math.tanh %214 : vector<8x128xf32>
    %216 = arith.mulf %211, %215 : vector<8x128xf32>
    %217 = arith.index_cast %c4_i32 : i32 to index
    %c0_85 = arith.constant 0 : index
    %c0_86 = arith.constant 0 : index
    %218 = vector.load %arg6[%217, %c0_85, %c0_86] : memref<8x8x128xf32, #tpu.memory_space<vmem>>, vector<1x8x128xf32>
    %219 = vector.shape_cast %218 : vector<1x8x128xf32> to vector<8x128xf32>
    %220 = vector.shape_cast %216 : vector<8x128xf32> to vector<1x8x128xf32>
    tpu.vector_store %arg6[%217, %c0_85, %c0_86], %220 {strides = array<i32>} : memref<8x8x128xf32, #tpu.memory_space<vmem>>, vector<1x8x128xf32>,
    %c5_i32 = arith.constant 5 : i32
    %221 = arith.index_cast %c5_i32 : i32 to index
    %c0_87 = arith.constant 0 : index
    %c0_88 = arith.constant 0 : index
    %222 = vector.load %arg7[%221, %c0_87, %c0_88] : memref<8x8x512xf32, #tpu.memory_space<vmem>>, vector<1x8x512xf32>
    %223 = vector.shape_cast %222 : vector<1x8x512xf32> to vector<8x512xf32>
    %224 = arith.truncf %216 : vector<8x128xf32> to vector<8x128xbf16>
    %cst_89 = arith.constant dense<0.000000e+00> : vector<8x512xf32>
    %225 = tpu.matmul %224, %13, %cst_89 {dimension_numbers = #tpu.dot_dimension_numbers<[1], [0], [0], [1], [0, 0, 1, 1], [], []>} : vector<8x128xbf16>, vector<128x512xbf16>, vector<8x512xf32> -> vector<8x512xf32>
    %226 = arith.addf %223, %225 : vector<8x512xf32>
    %227 = vector.extract_strided_slice %226 {offsets = [0, 0], sizes = [8, 128], strides = [1, 1]} : vector<8x512xf32> to vector<8x128xf32>
    %cst_90 = arith.constant 5.000000e-01 : f32
    %228 = vector.broadcast %cst_90 : f32 to vector<8x128xf32>
    %229 = arith.mulf %228, %227 : vector<8x128xf32>
    %230 = math.tanh %229 : vector<8x128xf32>
    %cst_91 = arith.constant 5.000000e-01 : f32
    %231 = vector.broadcast %cst_91 : f32 to vector<8x128xf32>
    %232 = arith.mulf %231, %230 : vector<8x128xf32>
    %cst_92 = arith.constant 5.000000e-01 : f32
    %233 = vector.broadcast %cst_92 : f32 to vector<8x128xf32>
    %234 = arith.addf %232, %233 : vector<8x128xf32>
    %235 = vector.extract_strided_slice %226 {offsets = [0, 128], sizes = [8, 128], strides = [1, 1]} : vector<8x512xf32> to vector<8x128xf32>
    %cst_93 = arith.constant 5.000000e-01 : f32
    %236 = vector.broadcast %cst_93 : f32 to vector<8x128xf32>
    %237 = arith.mulf %236, %235 : vector<8x128xf32>
    %238 = math.tanh %237 : vector<8x128xf32>
    %cst_94 = arith.constant 5.000000e-01 : f32
    %239 = vector.broadcast %cst_94 : f32 to vector<8x128xf32>
    %240 = arith.mulf %239, %238 : vector<8x128xf32>
    %cst_95 = arith.constant 5.000000e-01 : f32
    %241 = vector.broadcast %cst_95 : f32 to vector<8x128xf32>
    %242 = arith.addf %240, %241 : vector<8x128xf32>
    %243 = vector.extract_strided_slice %226 {offsets = [0, 256], sizes = [8, 128], strides = [1, 1]} : vector<8x512xf32> to vector<8x128xf32>
    %244 = math.tanh %243 : vector<8x128xf32>
    %245 = vector.extract_strided_slice %226 {offsets = [0, 384], sizes = [8, 128], strides = [1, 1]} : vector<8x512xf32> to vector<8x128xf32>
    %cst_96 = arith.constant 5.000000e-01 : f32
    %246 = vector.broadcast %cst_96 : f32 to vector<8x128xf32>
    %247 = arith.mulf %246, %245 : vector<8x128xf32>
    %248 = math.tanh %247 : vector<8x128xf32>
    %cst_97 = arith.constant 5.000000e-01 : f32
    %249 = vector.broadcast %cst_97 : f32 to vector<8x128xf32>
    %250 = arith.mulf %249, %248 : vector<8x128xf32>
    %cst_98 = arith.constant 5.000000e-01 : f32
    %251 = vector.broadcast %cst_98 : f32 to vector<8x128xf32>
    %252 = arith.addf %250, %251 : vector<8x128xf32>
    %253 = arith.mulf %242, %214 : vector<8x128xf32>
    %254 = arith.mulf %234, %244 : vector<8x128xf32>
    %255 = arith.addf %253, %254 : vector<8x128xf32>
    %256 = math.tanh %255 : vector<8x128xf32>
    %257 = arith.mulf %252, %256 : vector<8x128xf32>
    %258 = arith.index_cast %c5_i32 : i32 to index
    %c0_99 = arith.constant 0 : index
    %c0_100 = arith.constant 0 : index
    %259 = vector.load %arg6[%258, %c0_99, %c0_100] : memref<8x8x128xf32, #tpu.memory_space<vmem>>, vector<1x8x128xf32>
    %260 = vector.shape_cast %259 : vector<1x8x128xf32> to vector<8x128xf32>
    %261 = vector.shape_cast %257 : vector<8x128xf32> to vector<1x8x128xf32>
    tpu.vector_store %arg6[%258, %c0_99, %c0_100], %261 {strides = array<i32>} : memref<8x8x128xf32, #tpu.memory_space<vmem>>, vector<1x8x128xf32>,
    %c6_i32 = arith.constant 6 : i32
    %262 = arith.index_cast %c6_i32 : i32 to index
    %c0_101 = arith.constant 0 : index
    %c0_102 = arith.constant 0 : index
    %263 = vector.load %arg7[%262, %c0_101, %c0_102] : memref<8x8x512xf32, #tpu.memory_space<vmem>>, vector<1x8x512xf32>
    %264 = vector.shape_cast %263 : vector<1x8x512xf32> to vector<8x512xf32>
    %265 = arith.truncf %257 : vector<8x128xf32> to vector<8x128xbf16>
    %cst_103 = arith.constant dense<0.000000e+00> : vector<8x512xf32>
    %266 = tpu.matmul %265, %13, %cst_103 {dimension_numbers = #tpu.dot_dimension_numbers<[1], [0], [0], [1], [0, 0, 1, 1], [], []>} : vector<8x128xbf16>, vector<128x512xbf16>, vector<8x512xf32> -> vector<8x512xf32>
    %267 = arith.addf %264, %266 : vector<8x512xf32>
    %268 = vector.extract_strided_slice %267 {offsets = [0, 0], sizes = [8, 128], strides = [1, 1]} : vector<8x512xf32> to vector<8x128xf32>
    %cst_104 = arith.constant 5.000000e-01 : f32
    %269 = vector.broadcast %cst_104 : f32 to vector<8x128xf32>
    %270 = arith.mulf %269, %268 : vector<8x128xf32>
    %271 = math.tanh %270 : vector<8x128xf32>
    %cst_105 = arith.constant 5.000000e-01 : f32
    %272 = vector.broadcast %cst_105 : f32 to vector<8x128xf32>
    %273 = arith.mulf %272, %271 : vector<8x128xf32>
    %cst_106 = arith.constant 5.000000e-01 : f32
    %274 = vector.broadcast %cst_106 : f32 to vector<8x128xf32>
    %275 = arith.addf %273, %274 : vector<8x128xf32>
    %276 = vector.extract_strided_slice %267 {offsets = [0, 128], sizes = [8, 128], strides = [1, 1]} : vector<8x512xf32> to vector<8x128xf32>
    %cst_107 = arith.constant 5.000000e-01 : f32
    %277 = vector.broadcast %cst_107 : f32 to vector<8x128xf32>
    %278 = arith.mulf %277, %276 : vector<8x128xf32>
    %279 = math.tanh %278 : vector<8x128xf32>
    %cst_108 = arith.constant 5.000000e-01 : f32
    %280 = vector.broadcast %cst_108 : f32 to vector<8x128xf32>
    %281 = arith.mulf %280, %279 : vector<8x128xf32>
    %cst_109 = arith.constant 5.000000e-01 : f32
    %282 = vector.broadcast %cst_109 : f32 to vector<8x128xf32>
    %283 = arith.addf %281, %282 : vector<8x128xf32>
    %284 = vector.extract_strided_slice %267 {offsets = [0, 256], sizes = [8, 128], strides = [1, 1]} : vector<8x512xf32> to vector<8x128xf32>
    %285 = math.tanh %284 : vector<8x128xf32>
    %286 = vector.extract_strided_slice %267 {offsets = [0, 384], sizes = [8, 128], strides = [1, 1]} : vector<8x512xf32> to vector<8x128xf32>
    %cst_110 = arith.constant 5.000000e-01 : f32
    %287 = vector.broadcast %cst_110 : f32 to vector<8x128xf32>
    %288 = arith.mulf %287, %286 : vector<8x128xf32>
    %289 = math.tanh %288 : vector<8x128xf32>
    %cst_111 = arith.constant 5.000000e-01 : f32
    %290 = vector.broadcast %cst_111 : f32 to vector<8x128xf32>
    %291 = arith.mulf %290, %289 : vector<8x128xf32>
    %cst_112 = arith.constant 5.000000e-01 : f32
    %292 = vector.broadcast %cst_112 : f32 to vector<8x128xf32>
    %293 = arith.addf %291, %292 : vector<8x128xf32>
    %294 = arith.mulf %283, %255 : vector<8x128xf32>
    %295 = arith.mulf %275, %285 : vector<8x128xf32>
    %296 = arith.addf %294, %295 : vector<8x128xf32>
    %297 = math.tanh %296 : vector<8x128xf32>
    %298 = arith.mulf %293, %297 : vector<8x128xf32>
    %299 = arith.index_cast %c6_i32 : i32 to index
    %c0_113 = arith.constant 0 : index
    %c0_114 = arith.constant 0 : index
    %300 = vector.load %arg6[%299, %c0_113, %c0_114] : memref<8x8x128xf32, #tpu.memory_space<vmem>>, vector<1x8x128xf32>
    %301 = vector.shape_cast %300 : vector<1x8x128xf32> to vector<8x128xf32>
    %302 = vector.shape_cast %298 : vector<8x128xf32> to vector<1x8x128xf32>
    tpu.vector_store %arg6[%299, %c0_113, %c0_114], %302 {strides = array<i32>} : memref<8x8x128xf32, #tpu.memory_space<vmem>>, vector<1x8x128xf32>,
    %c7_i32 = arith.constant 7 : i32
    %303 = arith.index_cast %c7_i32 : i32 to index
    %c0_115 = arith.constant 0 : index
    %c0_116 = arith.constant 0 : index
    %304 = vector.load %arg7[%303, %c0_115, %c0_116] : memref<8x8x512xf32, #tpu.memory_space<vmem>>, vector<1x8x512xf32>
    %305 = vector.shape_cast %304 : vector<1x8x512xf32> to vector<8x512xf32>
    %306 = arith.truncf %298 : vector<8x128xf32> to vector<8x128xbf16>
    %cst_117 = arith.constant dense<0.000000e+00> : vector<8x512xf32>
    %307 = tpu.matmul %306, %13, %cst_117 {dimension_numbers = #tpu.dot_dimension_numbers<[1], [0], [0], [1], [0, 0, 1, 1], [], []>} : vector<8x128xbf16>, vector<128x512xbf16>, vector<8x512xf32> -> vector<8x512xf32>
    %308 = arith.addf %305, %307 : vector<8x512xf32>
    %309 = vector.extract_strided_slice %308 {offsets = [0, 0], sizes = [8, 128], strides = [1, 1]} : vector<8x512xf32> to vector<8x128xf32>
    %cst_118 = arith.constant 5.000000e-01 : f32
    %310 = vector.broadcast %cst_118 : f32 to vector<8x128xf32>
    %311 = arith.mulf %310, %309 : vector<8x128xf32>
    %312 = math.tanh %311 : vector<8x128xf32>
    %cst_119 = arith.constant 5.000000e-01 : f32
    %313 = vector.broadcast %cst_119 : f32 to vector<8x128xf32>
    %314 = arith.mulf %313, %312 : vector<8x128xf32>
    %cst_120 = arith.constant 5.000000e-01 : f32
    %315 = vector.broadcast %cst_120 : f32 to vector<8x128xf32>
    %316 = arith.addf %314, %315 : vector<8x128xf32>
    %317 = vector.extract_strided_slice %308 {offsets = [0, 128], sizes = [8, 128], strides = [1, 1]} : vector<8x512xf32> to vector<8x128xf32>
    %cst_121 = arith.constant 5.000000e-01 : f32
    %318 = vector.broadcast %cst_121 : f32 to vector<8x128xf32>
    %319 = arith.mulf %318, %317 : vector<8x128xf32>
    %320 = math.tanh %319 : vector<8x128xf32>
    %cst_122 = arith.constant 5.000000e-01 : f32
    %321 = vector.broadcast %cst_122 : f32 to vector<8x128xf32>
    %322 = arith.mulf %321, %320 : vector<8x128xf32>
    %cst_123 = arith.constant 5.000000e-01 : f32
    %323 = vector.broadcast %cst_123 : f32 to vector<8x128xf32>
    %324 = arith.addf %322, %323 : vector<8x128xf32>
    %325 = vector.extract_strided_slice %308 {offsets = [0, 256], sizes = [8, 128], strides = [1, 1]} : vector<8x512xf32> to vector<8x128xf32>
    %326 = math.tanh %325 : vector<8x128xf32>
    %327 = vector.extract_strided_slice %308 {offsets = [0, 384], sizes = [8, 128], strides = [1, 1]} : vector<8x512xf32> to vector<8x128xf32>
    %cst_124 = arith.constant 5.000000e-01 : f32
    %328 = vector.broadcast %cst_124 : f32 to vector<8x128xf32>
    %329 = arith.mulf %328, %327 : vector<8x128xf32>
    %330 = math.tanh %329 : vector<8x128xf32>
    %cst_125 = arith.constant 5.000000e-01 : f32
    %331 = vector.broadcast %cst_125 : f32 to vector<8x128xf32>
    %332 = arith.mulf %331, %330 : vector<8x128xf32>
    %cst_126 = arith.constant 5.000000e-01 : f32
    %333 = vector.broadcast %cst_126 : f32 to vector<8x128xf32>
    %334 = arith.addf %332, %333 : vector<8x128xf32>
    %335 = arith.mulf %324, %296 : vector<8x128xf32>
    %336 = arith.mulf %316, %326 : vector<8x128xf32>
    %337 = arith.addf %335, %336 : vector<8x128xf32>
    %338 = math.tanh %337 : vector<8x128xf32>
    %339 = arith.mulf %334, %338 : vector<8x128xf32>
    %340 = arith.index_cast %c7_i32 : i32 to index
    %c0_127 = arith.constant 0 : index
    %c0_128 = arith.constant 0 : index
    %341 = vector.load %arg6[%340, %c0_127, %c0_128] : memref<8x8x128xf32, #tpu.memory_space<vmem>>, vector<1x8x128xf32>
    %342 = vector.shape_cast %341 : vector<1x8x128xf32> to vector<8x128xf32>
    %343 = vector.shape_cast %339 : vector<8x128xf32> to vector<1x8x128xf32>
    tpu.vector_store %arg6[%340, %c0_127, %c0_128], %343 {strides = array<i32>} : memref<8x8x128xf32, #tpu.memory_space<vmem>>, vector<1x8x128xf32>,
    %c8_i32 = arith.constant 8 : i32
    %c0_129 = arith.constant 0 : index
    %c0_130 = arith.constant 0 : index
    %344 = vector.load %arg8[%c0_129, %c0_130] : memref<8x128xf32, #tpu.memory_space<vmem>>, vector<8x128xf32>
    tpu.vector_store %arg8[%c0_129, %c0_130], %339 {strides = array<i32>} : memref<8x128xf32, #tpu.memory_space<vmem>>, vector<8x128xf32>,
    %c0_131 = arith.constant 0 : index
    %c0_132 = arith.constant 0 : index
    %345 = vector.load %arg9[%c0_131, %c0_132] : memref<8x128xf32, #tpu.memory_space<vmem>>, vector<8x128xf32>
    tpu.vector_store %arg9[%c0_131, %c0_132], %337 {strides = array<i32>} : memref<8x128xf32, #tpu.memory_space<vmem>>, vector<8x128xf32>,
    return
  }
  func.func @transform_0(%arg0: i32, %arg1: i32) -> (i32, i32, i32) {
    %c0_i32 = arith.constant 0 : i32
    %c0_i32_0 = arith.constant 0 : i32
    return %arg1, %arg0, %c0_i32 : i32, i32, i32
  }
  func.func @transform_1(%arg0: i32, %arg1: i32) -> (i32, i32) {
    %c0_i32 = arith.constant 0 : i32
    %c0_i32_0 = arith.constant 0 : i32
    %c0_i32_1 = arith.constant 0 : i32
    return %c0_i32, %c0_i32_0 : i32, i32
  }
  func.func @transform_2(%arg0: i32, %arg1: i32) -> (i32, i32) {
    %c0_i32 = arith.constant 0 : i32
    %c0_i32_0 = arith.constant 0 : i32
    %c0_i32_1 = arith.constant 0 : i32
    return %c0_i32, %c0_i32_0 : i32, i32
  }
  func.func @transform_3(%arg0: i32, %arg1: i32) -> (i32, i32) {
    %c0_i32 = arith.constant 0 : i32
    %c0_i32_0 = arith.constant 0 : i32
    %c0_i32_1 = arith.constant 0 : i32
    return %c0_i32, %c0_i32_0 : i32, i32
  }
  func.func @transform_4(%arg0: i32, %arg1: i32) -> (i32, i32, i32) {
    %c0_i32 = arith.constant 0 : i32
    %c0_i32_0 = arith.constant 0 : i32
    return %arg1, %arg0, %c0_i32 : i32, i32, i32
  }
}

</mosaic_0001>

<llo_original>
// kernel: encoder_forward.2
$region0: #{encoder_forward.2}
  #allocation0 [shape = 'u32[]', space=smem, size = 0x4, offset = 0x4, fixed_abs, tag = 'smem constant byte address 0x4 - core index']
  #allocation1 [shape = 'u32[144,128]{1,0:T(1,128)}', space=vmem, size = 0x12000, scoped, tag = 'internal scratch']
  #allocation2 [shape = 'f32[8,8,512]{2,1,0:T(8,128)}', space=vmem, size = 0x20000, scoped, tag = 'scratch operand']
  #allocation3 [shape = 'f32[8,128]{1,0:T(8,128)}', space=vmem, size = 0x1000, scoped, tag = 'scratch operand']
  #allocation4 [shape = 'f32[8,128]{1,0:T(8,128)}', space=vmem, size = 0x1000, scoped, tag = 'scratch operand']
  %s0 = inlined_call_operand.vmem [shape: f32[8,8,128], index: 0, kind: input, shape index: {}]
  %s1 = inlined_call_operand.vmem [shape: bf16[128,512], index: 1, kind: input, shape index: {}]
  %s2 = inlined_call_operand.vmem [shape: f32[1,512], index: 2, kind: input, shape index: {}]
  %s3 = inlined_call_operand.vmem [shape: bf16[128,512], index: 3, kind: input, shape index: {}]
  %s4 = inlined_call_operand.vmem [shape: f32[8,8,128], index: 4, kind: output, shape index: {}]
  %s5 = sld [smem:[#allocation0]]
  $region30: #{encoder_forward.2} parent=0
    _
  %s7 = ssub.s32 1, %s5
  %s8 = scalar_select 0, %s7, %s5
  // Predicated region
  $region2: #{encoder_forward.2} parent=0 // pred_check
    _
  $region3: #{encoder_forward.2} parent=0 // pred_check_branch
    %10 = sbr.rel (0) target = $region5
  $region4: #{encoder_forward.2} parent=0 // pred_region
    _
  $region5: #{encoder_forward.2} parent=0 // pred_fallthru
    _
  // Predicated region
  $region6: #{encoder_forward.2} parent=0 // pred_check
    _
  $region7: #{encoder_forward.2} parent=0 // pred_check_branch
    %12 = sbr.rel (0) target = $region9
  $region8: #{encoder_forward.2} parent=0 // pred_region
    _
  $region9: #{encoder_forward.2} parent=0 // pred_fallthru
    _
  // Predicated region
  $region10: #{encoder_forward.2} parent=0 // pred_check
    _
  $region11: #{encoder_forward.2} parent=0 // pred_check_branch
    %14 = sbr.rel (0) target = $region13
  $region12: #{encoder_forward.2} parent=0 // pred_region
    _
  $region13: #{encoder_forward.2} parent=0 // pred_fallthru
    _
  // Predicated region
  $region14: #{encoder_forward.2} parent=0 // pred_check
    _
  $region15: #{encoder_forward.2} parent=0 // pred_check_branch
    %16 = sbr.rel (0) target = $region17
  $region16: #{encoder_forward.2} parent=0 // pred_region
    _
  $region17: #{encoder_forward.2} parent=0 // pred_fallthru
    _
  %p18 = scmp.eq.s32.totalorder 0, 0
  // Predicated region
  $region18: #{encoder_forward.2} parent=0 // pred_check
    %p19 = pneg %p18
  $region19: #{encoder_forward.2} parent=0 // pred_check_branch
    %21 = sbr.rel (%p19) target = $region21
  $region20: #{encoder_forward.2} parent=0 // pred_region
    %22 = vst [vmem:[#allocation3] sm:$0xff] 0.0
    %23 = vst [vmem:[#allocation4] sm:$0xff] 0.0
  $region21: #{encoder_forward.2} parent=0 // pred_fallthru
    _
  %v24 = vld [vmem:[%s0] sm:$0xff]
  %v25 = vld [vmem:[%s0 + $0x8] sm:$0xff]
  %v26 = vld [vmem:[%s0 + $0x10] sm:$0xff]
  %v27 = vld [vmem:[%s0 + $0x18] sm:$0xff]
  %v28 = vld [vmem:[%s0 + $0x20] sm:$0xff]
  %v29 = vld [vmem:[%s0 + $0x28] sm:$0xff]
  %v30 = vld [vmem:[%s0 + $0x30] sm:$0xff]
  %v31 = vld [vmem:[%s0 + $0x38] sm:$0xff]
  %v32 = vpack.c.bf16 %v25, %v24
  %v33 = vpack.c.bf16 %v27, %v26
  %v34 = vpack.c.bf16 %v29, %v28
  %v35 = vpack.c.bf16 %v31, %v30
  %v36 = vld [vmem:[%s1] sm:$0xff]
  %v37 = vld [vmem:[%s1 + $0x8] sm:$0xff]
  %v38 = vld [vmem:[%s1 + $0x10] sm:$0xff]
  %v39 = vld [vmem:[%s1 + $0x18] sm:$0xff]
  %v40 = vld [vmem:[%s1 + $0x20] sm:$0xff]
  %v41 = vld [vmem:[%s1 + $0x28] sm:$0xff]
  %v42 = vld [vmem:[%s1 + $0x30] sm:$0xff]
  %v43 = vld [vmem:[%s1 + $0x38] sm:$0xff]
  %v44 = vld [vmem:[%s1 + $0x40] sm:$0xff]
  %v45 = vld [vmem:[%s1 + $0x48] sm:$0xff]
  %v46 = vld [vmem:[%s1 + $0x50] sm:$0xff]
  %v47 = vld [vmem:[%s1 + $0x58] sm:$0xff]
  %v48 = vld [vmem:[%s1 + $0x60] sm:$0xff]
  %v49 = vld [vmem:[%s1 + $0x68] sm:$0xff]
  %v50 = vld [vmem:[%s1 + $0x70] sm:$0xff]
  %v51 = vld [vmem:[%s1 + $0x78] sm:$0xff]
  %v52 = vld [vmem:[%s1 + $0x80] sm:$0xff]
  %v53 = vld [vmem:[%s1 + $0x88] sm:$0xff]
  %v54 = vld [vmem:[%s1 + $0x90] sm:$0xff]
  %v55 = vld [vmem:[%s1 + $0x98] sm:$0xff]
  %v56 = vld [vmem:[%s1 + $0xa0] sm:$0xff]
  %v57 = vld [vmem:[%s1 + $0xa8] sm:$0xff]
  %v58 = vld [vmem:[%s1 + $0xb0] sm:$0xff]
  %v59 = vld [vmem:[%s1 + $0xb8] sm:$0xff]
  %v60 = vld [vmem:[%s1 + $0xc0] sm:$0xff]
  %v61 = vld [vmem:[%s1 + $0xc8] sm:$0xff]
  %v62 = vld [vmem:[%s1 + $0xd0] sm:$0xff]
  %v63 = vld [vmem:[%s1 + $0xd8] sm:$0xff]
  %v64 = vld [vmem:[%s1 + $0xe0] sm:$0xff]
  %v65 = vld [vmem:[%s1 + $0xe8] sm:$0xff]
  %v66 = vld [vmem:[%s1 + $0xf0] sm:$0xff]
  %v67 = vld [vmem:[%s1 + $0xf8] sm:$0xff]
  %v68 = vld [vmem:[%s2] sm:$0xf]
  %v70 = vlaneseq
  %v71 = vshrl.u32 %v70, 7
  %v72 = vsub.s32 0, %v71
  %v73 = vrot.slane %v68, %v72
  %v74 = vlaneseq
  %v75 = vshrl.u32 %v74, 7
  %v76 = vsub.s32 1, %v75
  %v77 = vrot.slane %v68, %v76
  %v78 = vlaneseq
  %v79 = vshrl.u32 %v78, 7
  %v80 = vsub.s32 2, %v79
  %v81 = vrot.slane %v68, %v80
  %v82 = vlaneseq
  %v83 = vshrl.u32 %v82, 7
  %v84 = vsub.s32 3, %v83
  %v85 = vrot.slane %v68, %v84
  %v122 = vunpack.c.l.b16 %v36
  %v123 = vunpack.c.h.b16 %v36
  %v124 = vunpack.c.l.b16 %v37
  %v125 = vunpack.c.h.b16 %v37
  %v126 = vunpack.c.l.b16 %v38
  %v127 = vunpack.c.h.b16 %v38
  %v128 = vunpack.c.l.b16 %v39
  %v129 = vunpack.c.h.b16 %v39
  %v130 = vunpack.c.l.b16 %v40
  %v131 = vunpack.c.h.b16 %v40
  %v132 = vunpack.c.l.b16 %v41
  %v133 = vunpack.c.h.b16 %v41
  %v134 = vunpack.c.l.b16 %v42
  %v135 = vunpack.c.h.b16 %v42
  %v136 = vunpack.c.l.b16 %v43
  %v137 = vunpack.c.h.b16 %v43
  %v138 = vunpack.c.l.b16 %v44
  %v139 = vunpack.c.h.b16 %v44
  %v140 = vunpack.c.l.b16 %v45
  %v141 = vunpack.c.h.b16 %v45
  %v142 = vunpack.c.l.b16 %v46
  %v143 = vunpack.c.h.b16 %v46
  %v144 = vunpack.c.l.b16 %v47
  %v145 = vunpack.c.h.b16 %v47
  %v146 = vunpack.c.l.b16 %v48
  %v147 = vunpack.c.h.b16 %v48
  %v148 = vunpack.c.l.b16 %v49
  %v149 = vunpack.c.h.b16 %v49
  %v150 = vunpack.c.l.b16 %v50
  %v151 = vunpack.c.h.b16 %v50
  %v152 = vunpack.c.l.b16 %v51
  %v153 = vunpack.c.h.b16 %v51
  %v154 = vunpack.c.l.b16 %v52
  %v155 = vunpack.c.h.b16 %v52
  %v156 = vunpack.c.l.b16 %v53
  %v157 = vunpack.c.h.b16 %v53
  %v158 = vunpack.c.l.b16 %v54
  %v159 = vunpack.c.h.b16 %v54
  %v160 = vunpack.c.l.b16 %v55
  %v161 = vunpack.c.h.b16 %v55
  %v162 = vunpack.c.l.b16 %v56
  %v163 = vunpack.c.h.b16 %v56
  %v164 = vunpack.c.l.b16 %v57
  %v165 = vunpack.c.h.b16 %v57
  %v166 = vunpack.c.l.b16 %v58
  %v167 = vunpack.c.h.b16 %v58
  %v168 = vunpack.c.l.b16 %v59
  %v169 = vunpack.c.h.b16 %v59
  %v170 = vunpack.c.l.b16 %v60
  %v171 = vunpack.c.h.b16 %v60
  %v172 = vunpack.c.l.b16 %v61
  %v173 = vunpack.c.h.b16 %v61
  %v174 = vunpack.c.l.b16 %v62
  %v175 = vunpack.c.h.b16 %v62
  %v176 = vunpack.c.l.b16 %v63
  %v177 = vunpack.c.h.b16 %v63
  %v178 = vunpack.c.l.b16 %v64
  %v179 = vunpack.c.h.b16 %v64
  %v180 = vunpack.c.l.b16 %v65
  %v181 = vunpack.c.h.b16 %v65
  %v182 = vunpack.c.l.b16 %v66
  %v183 = vunpack.c.h.b16 %v66
  %v184 = vunpack.c.l.b16 %v67
  %v185 = vunpack.c.h.b16 %v67
  %v186 = vpack.c.b16 %v126, %v122
  %v187 = vpack.c.b16 %v127, %v123
  %v188 = vpack.c.b16 %v128, %v124
  %v189 = vpack.c.b16 %v129, %v125
  %v190 = vpack.c.b16 %v134, %v130
  %v191 = vpack.c.b16 %v135, %v131
  %v192 = vpack.c.b16 %v136, %v132
  %v193 = vpack.c.b16 %v137, %v133
  %v194 = vpack.c.b16 %v142, %v138
  %v195 = vpack.c.b16 %v143, %v139
  %v196 = vpack.c.b16 %v144, %v140
  %v197 = vpack.c.b16 %v145, %v141
  %v198 = vpack.c.b16 %v150, %v146
  %v199 = vpack.c.b16 %v151, %v147
  %v200 = vpack.c.b16 %v152, %v148
  %v201 = vpack.c.b16 %v153, %v149
  %v202 = vpack.c.b16 %v158, %v154
  %v203 = vpack.c.b16 %v159, %v155
  %v204 = vpack.c.b16 %v160, %v156
  %v205 = vpack.c.b16 %v161, %v157
  %v206 = vpack.c.b16 %v166, %v162
  %v207 = vpack.c.b16 %v167, %v163
  %v208 = vpack.c.b16 %v168, %v164
  %v209 = vpack.c.b16 %v169, %v165
  %v210 = vpack.c.b16 %v174, %v170
  %v211 = vpack.c.b16 %v175, %v171
  %v212 = vpack.c.b16 %v176, %v172
  %v213 = vpack.c.b16 %v177, %v173
  %v214 = vpack.c.b16 %v182, %v178
  %v215 = vpack.c.b16 %v183, %v179
  %v216 = vpack.c.b16 %v184, %v180
  %v217 = vpack.c.b16 %v185, %v181
  %250 = vmatprep.subr.bf16.mxu0 %v187
  %251 = vmatpush1.bf16.msra.mxu0 %v186
  %252 = vmatprep.subr.bf16.mxu0 %v191
  %253 = vmatpush1.bf16.msra.mxu0 %v190
  %254 = vmatprep.subr.bf16.mxu0 %v195
  %255 = vmatpush1.bf16.msra.mxu0 %v194
  %256 = vmatprep.subr.bf16.mxu0 %v199
  %257 = vmatpush1.bf16.msra.mxu0 %v198
  %258 = vmatprep.subr.bf16.mxu0 %v203
  %259 = vmatpush1.bf16.msra.mxu0 %v202
  %260 = vmatprep.subr.bf16.mxu0 %v207
  %261 = vmatpush1.bf16.msra.mxu0 %v206
  %262 = vmatprep.subr.bf16.mxu0 %v211
  %263 = vmatpush1.bf16.msra.mxu0 %v210
  %264 = vmatprep.subr.bf16.mxu0 %v215
  %265 = vmatpush1.bf16.msra.mxu0 %v214
  %266 = vmatprep.subr.bf16.mxu0 0
  %267 = vmatpush1.bf16.msra.mxu0 0
  %268 = vmatprep.subr.bf16.mxu0 0
  %269 = vmatpush1.bf16.msra.mxu0 0
  %270 = vmatprep.subr.bf16.mxu0 0
  %271 = vmatpush1.bf16.msra.mxu0 0
  %272 = vmatprep.subr.bf16.mxu0 0
  %273 = vmatpush1.bf16.msra.mxu0 0
  %274 = vmatprep.subr.bf16.mxu0 0
  %275 = vmatpush1.bf16.msra.mxu0 0
  %276 = vmatprep.subr.bf16.mxu0 0
  %277 = vmatpush1.bf16.msra.mxu0 0
  %278 = vmatprep.subr.bf16.mxu0 0
  %279 = vmatpush1.bf16.msra.mxu0 0
  %280 = vmatprep.subr.bf16.mxu0 0
  %281 = vmatpush1.bf16.msra.mxu0 0
  %282 = vmatprep.mubr.bf16.mxu0 0
  %283 = vmatmul.mubr.bf16.gmra.mrb[0].mxu0 %v32
  %v284 = vpop.f32.mrb[0].mxu0
  %v285 = vadd.f32 %v73, %v284
  %v286 = vpop.f32.mrb[0].mxu0
  %v287 = vadd.f32 %v77, %v286
  %v288 = vpop.f32.mrb[0].mxu0
  %v289 = vadd.f32 %v73, %v288
  %v290 = vpop.f32.mrb[0].mxu0
  %v291 = vadd.f32 %v77, %v290
  %292 = vmatprep.mubr.bf16.mxu0 0
  %293 = vmatmul.mubr.bf16.gmra.mrb[0].mxu0 %v33
  %v294 = vpop.f32.mrb[0].mxu0
  %v295 = vadd.f32 %v73, %v294
  %v296 = vpop.f32.mrb[0].mxu0
  %v297 = vadd.f32 %v77, %v296
  %v298 = vpop.f32.mrb[0].mxu0
  %v299 = vadd.f32 %v73, %v298
  %v300 = vpop.f32.mrb[0].mxu0
  %v301 = vadd.f32 %v77, %v300
  %302 = vmatprep.mubr.bf16.mxu0 0
  %303 = vmatmul.mubr.bf16.gmra.mrb[0].mxu0 %v34
  %v304 = vpop.f32.mrb[0].mxu0
  %v305 = vadd.f32 %v73, %v304
  %v306 = vpop.f32.mrb[0].mxu0
  %v307 = vadd.f32 %v77, %v306
  %v308 = vpop.f32.mrb[0].mxu0
  %v309 = vadd.f32 %v73, %v308
  %v310 = vpop.f32.mrb[0].mxu0
  %v311 = vadd.f32 %v77, %v310
  %312 = vmatprep.mubr.bf16.mxu0 0
  %313 = vmatmul.mubr.bf16.gmra.mrb[0].mxu0 %v35
  %v314 = vpop.f32.mrb[0].mxu0
  %v315 = vadd.f32 %v73, %v314
  %v316 = vpop.f32.mrb[0].mxu0
  %v317 = vadd.f32 %v77, %v316
  %v318 = vpop.f32.mrb[0].mxu0
  %v319 = vadd.f32 %v73, %v318
  %v320 = vpop.f32.mrb[0].mxu0
  %v321 = vadd.f32 %v77, %v320
  %322 = vdwg.mxu0
  %323 = vmatprep.subr.bf16.mxu0 %v189
  %324 = vmatpush1.bf16.msra.mxu0 %v188
  %325 = vmatprep.subr.bf16.mxu0 %v193
  %326 = vmatpush1.bf16.msra.mxu0 %v192
  %327 = vmatprep.subr.bf16.mxu0 %v197
  %328 = vmatpush1.bf16.msra.mxu0 %v196
  %329 = vmatprep.subr.bf16.mxu0 %v201
  %330 = vmatpush1.bf16.msra.mxu0 %v200
  %331 = vmatprep.subr.bf16.mxu0 %v205
  %332 = vmatpush1.bf16.msra.mxu0 %v204
  %333 = vmatprep.subr.bf16.mxu0 %v209
  %334 = vmatpush1.bf16.msra.mxu0 %v208
  %335 = vmatprep.subr.bf16.mxu0 %v213
  %336 = vmatpush1.bf16.msra.mxu0 %v212
  %337 = vmatprep.subr.bf16.mxu0 %v217
  %338 = vmatpush1.bf16.msra.mxu0 %v216
  %339 = vmatprep.subr.bf16.mxu0 0
  %340 = vmatpush1.bf16.msra.mxu0 0
  %341 = vmatprep.subr.bf16.mxu0 0
  %342 = vmatpush1.bf16.msra.mxu0 0
  %343 = vmatprep.subr.bf16.mxu0 0
  %344 = vmatpush1.bf16.msra.mxu0 0
  %345 = vmatprep.subr.bf16.mxu0 0
  %346 = vmatpush1.bf16.msra.mxu0 0
  %347 = vmatprep.subr.bf16.mxu0 0
  %348 = vmatpush1.bf16.msra.mxu0 0
  %349 = vmatprep.subr.bf16.mxu0 0
  %350 = vmatpush1.bf16.msra.mxu0 0
  %351 = vmatprep.subr.bf16.mxu0 0
  %352 = vmatpush1.bf16.msra.mxu0 0
  %353 = vmatprep.subr.bf16.mxu0 0
  %354 = vmatpush1.bf16.msra.mxu0 0
  %355 = vmatprep.mubr.bf16.mxu0 0
  %356 = vmatmul.mubr.bf16.gmra.mrb[0].mxu0 %v32
  %v357 = vpop.f32.mrb[0].mxu0
  %v358 = vadd.f32 %v81, %v357
  %v359 = vpop.f32.mrb[0].mxu0
  %v360 = vadd.f32 %v85, %v359
  %v361 = vpop.f32.mrb[0].mxu0
  %v362 = vadd.f32 %v81, %v361
  %v363 = vpop.f32.mrb[0].mxu0
  %v364 = vadd.f32 %v85, %v363
  %365 = vmatprep.mubr.bf16.mxu0 0
  %366 = vmatmul.mubr.bf16.gmra.mrb[0].mxu0 %v33
  %v367 = vpop.f32.mrb[0].mxu0
  %v368 = vadd.f32 %v81, %v367
  %v369 = vpop.f32.mrb[0].mxu0
  %v370 = vadd.f32 %v85, %v369
  %v371 = vpop.f32.mrb[0].mxu0
  %v372 = vadd.f32 %v81, %v371
  %v373 = vpop.f32.mrb[0].mxu0
  %v374 = vadd.f32 %v85, %v373
  %375 = vmatprep.mubr.bf16.mxu0 0
  %376 = vmatmul.mubr.bf16.gmra.mrb[0].mxu0 %v34
  %v377 = vpop.f32.mrb[0].mxu0
  %v378 = vadd.f32 %v81, %v377
  %v379 = vpop.f32.mrb[0].mxu0
  %v380 = vadd.f32 %v85, %v379
  %v381 = vpop.f32.mrb[0].mxu0
  %v382 = vadd.f32 %v81, %v381
  %v383 = vpop.f32.mrb[0].mxu0
  %v384 = vadd.f32 %v85, %v383
  %385 = vmatprep.mubr.bf16.mxu0 0
  %386 = vmatmul.mubr.bf16.gmra.mrb[0].mxu0 %v35
  %v387 = vpop.f32.mrb[0].mxu0
  %v388 = vadd.f32 %v81, %v387
  %v389 = vpop.f32.mrb[0].mxu0
  %v390 = vadd.f32 %v85, %v389
  %v391 = vpop.f32.mrb[0].mxu0
  %v392 = vadd.f32 %v81, %v391
  %v393 = vpop.f32.mrb[0].mxu0
  %v394 = vadd.f32 %v85, %v393
  %395 = vdwg.mxu0
  %396 = vst [vmem:[#allocation2] sm:$0xff] %v285
  %397 = vst [vmem:[#allocation2 + $0x8] sm:$0xff] %v287
  %398 = vst [vmem:[#allocation2 + $0x10] sm:$0xff] %v358
  %399 = vst [vmem:[#allocation2 + $0x18] sm:$0xff] %v360
  %400 = vst [vmem:[#allocation2 + $0x20] sm:$0xff] %v289
  %401 = vst [vmem:[#allocation2 + $0x28] sm:$0xff] %v291
  %402 = vst [vmem:[#allocation2 + $0x30] sm:$0xff] %v362
  %403 = vst [vmem:[#allocation2 + $0x38] sm:$0xff] %v364
  %404 = vst [vmem:[#allocation2 + $0x40] sm:$0xff] %v295
  %405 = vst [vmem:[#allocation2 + $0x48] sm:$0xff] %v297
  %406 = vst [vmem:[#allocation2 + $0x50] sm:$0xff] %v368
  %407 = vst [vmem:[#allocation2 + $0x58] sm:$0xff] %v370
  %408 = vst [vmem:[#allocation2 + $0x60] sm:$0xff] %v299
  %409 = vst [vmem:[#allocation2 + $0x68] sm:$0xff] %v301
  %410 = vst [vmem:[#allocation2 + $0x70] sm:$0xff] %v372
  %411 = vst [vmem:[#allocation2 + $0x78] sm:$0xff] %v374
  %412 = vst [vmem:[#allocation2 + $0x80] sm:$0xff] %v305
  %413 = vst [vmem:[#allocation2 + $0x88] sm:$0xff] %v307
  %414 = vst [vmem:[#allocation2 + $0x90] sm:$0xff] %v378
  %415 = vst [vmem:[#allocation2 + $0x98] sm:$0xff] %v380
  %416 = vst [vmem:[#allocation2 + $0xa0] sm:$0xff] %v309
  %417 = vst [vmem:[#allocation2 + $0xa8] sm:$0xff] %v311
  %418 = vst [vmem:[#allocation2 + $0xb0] sm:$0xff] %v382
  %419 = vst [vmem:[#allocation2 + $0xb8] sm:$0xff] %v384
  %420 = vst [vmem:[#allocation2 + $0xc0] sm:$0xff] %v315
  %421 = vst [vmem:[#allocation2 + $0xc8] sm:$0xff] %v317
  %422 = vst [vmem:[#allocation2 + $0xd0] sm:$0xff] %v388
  %423 = vst [vmem:[#allocation2 + $0xd8] sm:$0xff] %v390
  %424 = vst [vmem:[#allocation2 + $0xe0] sm:$0xff] %v319
  %425 = vst [vmem:[#allocation2 + $0xe8] sm:$0xff] %v321
  %426 = vst [vmem:[#allocation2 + $0xf0] sm:$0xff] %v392
  %427 = vst [vmem:[#allocation2 + $0xf8] sm:$0xff] %v394
  %v428 = vld [vmem:[%s3] sm:$0xff]
  %v429 = vld [vmem:[%s3 + $0x8] sm:$0xff]
  %v430 = vld [vmem:[%s3 + $0x10] sm:$0xff]
  %v431 = vld [vmem:[%s3 + $0x18] sm:$0xff]
  %v432 = vld [vmem:[%s3 + $0x20] sm:$0xff]
  %v433 = vld [vmem:[%s3 + $0x28] sm:$0xff]
  %v434 = vld [vmem:[%s3 + $0x30] sm:$0xff]
  %v435 = vld [vmem:[%s3 + $0x38] sm:$0xff]
  %v436 = vld [vmem:[%s3 + $0x40] sm:$0xff]
  %v437 = vld [vmem:[%s3 + $0x48] sm:$0xff]
  %v438 = vld [vmem:[%s3 + $0x50] sm:$0xff]
  %v439 = vld [vmem:[%s3 + $0x58] sm:$0xff]
  %v440 = vld [vmem:[%s3 + $0x60] sm:$0xff]
  %v441 = vld [vmem:[%s3 + $0x68] sm:$0xff]
  %v442 = vld [vmem:[%s3 + $0x70] sm:$0xff]
  %v443 = vld [vmem:[%s3 + $0x78] sm:$0xff]
  %v444 = vld [vmem:[%s3 + $0x80] sm:$0xff]
  %v445 = vld [vmem:[%s3 + $0x88] sm:$0xff]
  %v446 = vld [vmem:[%s3 + $0x90] sm:$0xff]
  %v447 = vld [vmem:[%s3 + $0x98] sm:$0xff]
  %v448 = vld [vmem:[%s3 + $0xa0] sm:$0xff]
  %v449 = vld [vmem:[%s3 + $0xa8] sm:$0xff]
  %v450 = vld [vmem:[%s3 + $0xb0] sm:$0xff]
  %v451 = vld [vmem:[%s3 + $0xb8] sm:$0xff]
  %v452 = vld [vmem:[%s3 + $0xc0] sm:$0xff]
  %v453 = vld [vmem:[%s3 + $0xc8] sm:$0xff]
  %v454 = vld [vmem:[%s3 + $0xd0] sm:$0xff]
  %v455 = vld [vmem:[%s3 + $0xd8] sm:$0xff]
  %v456 = vld [vmem:[%s3 + $0xe0] sm:$0xff]
  %v457 = vld [vmem:[%s3 + $0xe8] sm:$0xff]
  %v458 = vld [vmem:[%s3 + $0xf0] sm:$0xff]
  %v459 = vld [vmem:[%s3 + $0xf8] sm:$0xff]
  %v460 = vld [vmem:[#allocation3] sm:$0xff]
  %v461 = vld [vmem:[#allocation4] sm:$0xff]
  %v462 = vld [vmem:[#allocation2] sm:$0xff]
  %v463 = vld [vmem:[#allocation2 + $0x8] sm:$0xff]
  %v464 = vld [vmem:[#allocation2 + $0x10] sm:$0xff]
  %v465 = vld [vmem:[#allocation2 + $0x18] sm:$0xff]
  %v466 = vpack.c.bf16 %v460, %v460
  %v499 = vunpack.c.l.b16 %v428
  %v500 = vunpack.c.h.b16 %v428
  %v501 = vunpack.c.l.b16 %v429
  %v502 = vunpack.c.h.b16 %v429
  %v503 = vunpack.c.l.b16 %v430
  %v504 = vunpack.c.h.b16 %v430
  %v505 = vunpack.c.l.b16 %v431
  %v506 = vunpack.c.h.b16 %v431
  %v507 = vunpack.c.l.b16 %v432
  %v508 = vunpack.c.h.b16 %v432
  %v509 = vunpack.c.l.b16 %v433
  %v510 = vunpack.c.h.b16 %v433
  %v511 = vunpack.c.l.b16 %v434
  %v512 = vunpack.c.h.b16 %v434
  %v513 = vunpack.c.l.b16 %v435
  %v514 = vunpack.c.h.b16 %v435
  %v515 = vunpack.c.l.b16 %v436
  %v516 = vunpack.c.h.b16 %v436
  %v517 = vunpack.c.l.b16 %v437
  %v518 = vunpack.c.h.b16 %v437
  %v519 = vunpack.c.l.b16 %v438
  %v520 = vunpack.c.h.b16 %v438
  %v521 = vunpack.c.l.b16 %v439
  %v522 = vunpack.c.h.b16 %v439
  %v523 = vunpack.c.l.b16 %v440
  %v524 = vunpack.c.h.b16 %v440
  %v525 = vunpack.c.l.b16 %v441
  %v526 = vunpack.c.h.b16 %v441
  %v527 = vunpack.c.l.b16 %v442
  %v528 = vunpack.c.h.b16 %v442
  %v529 = vunpack.c.l.b16 %v443
  %v530 = vunpack.c.h.b16 %v443
  %v531 = vunpack.c.l.b16 %v444
  %v532 = vunpack.c.h.b16 %v444
  %v533 = vunpack.c.l.b16 %v445
  %v534 = vunpack.c.h.b16 %v445
  %v535 = vunpack.c.l.b16 %v446
  %v536 = vunpack.c.h.b16 %v446
  %v537 = vunpack.c.l.b16 %v447
  %v538 = vunpack.c.h.b16 %v447
  %v539 = vunpack.c.l.b16 %v448
  %v540 = vunpack.c.h.b16 %v448
  %v541 = vunpack.c.l.b16 %v449
  %v542 = vunpack.c.h.b16 %v449
  %v543 = vunpack.c.l.b16 %v450
  %v544 = vunpack.c.h.b16 %v450
  %v545 = vunpack.c.l.b16 %v451
  %v546 = vunpack.c.h.b16 %v451
  %v547 = vunpack.c.l.b16 %v452
  %v548 = vunpack.c.h.b16 %v452
  %v549 = vunpack.c.l.b16 %v453
  %v550 = vunpack.c.h.b16 %v453
  %v551 = vunpack.c.l.b16 %v454
  %v552 = vunpack.c.h.b16 %v454
  %v553 = vunpack.c.l.b16 %v455
  %v554 = vunpack.c.h.b16 %v455
  %v555 = vunpack.c.l.b16 %v456
  %v556 = vunpack.c.h.b16 %v456
  %v557 = vunpack.c.l.b16 %v457
  %v558 = vunpack.c.h.b16 %v457
  %v559 = vunpack.c.l.b16 %v458
  %v560 = vunpack.c.h.b16 %v458
  %v561 = vunpack.c.l.b16 %v459
  %v562 = vunpack.c.h.b16 %v459
  %v563 = vpack.c.b16 %v503, %v499
  %v564 = vpack.c.b16 %v504, %v500
  %v565 = vpack.c.b16 %v505, %v501
  %v566 = vpack.c.b16 %v506, %v502
  %v567 = vpack.c.b16 %v511, %v507
  %v568 = vpack.c.b16 %v512, %v508
  %v569 = vpack.c.b16 %v513, %v509
  %v570 = vpack.c.b16 %v514, %v510
  %v571 = vpack.c.b16 %v519, %v515
  %v572 = vpack.c.b16 %v520, %v516
  %v573 = vpack.c.b16 %v521, %v517
  %v574 = vpack.c.b16 %v522, %v518
  %v575 = vpack.c.b16 %v527, %v523
  %v576 = vpack.c.b16 %v528, %v524
  %v577 = vpack.c.b16 %v529, %v525
  %v578 = vpack.c.b16 %v530, %v526
  %v579 = vpack.c.b16 %v535, %v531
  %v580 = vpack.c.b16 %v536, %v532
  %v581 = vpack.c.b16 %v537, %v533
  %v582 = vpack.c.b16 %v538, %v534
  %v583 = vpack.c.b16 %v543, %v539
  %v584 = vpack.c.b16 %v544, %v540
  %v585 = vpack.c.b16 %v545, %v541
  %v586 = vpack.c.b16 %v546, %v542
  %v587 = vpack.c.b16 %v551, %v547
  %v588 = vpack.c.b16 %v552, %v548
  %v589 = vpack.c.b16 %v553, %v549
  %v590 = vpack.c.b16 %v554, %v550
  %v591 = vpack.c.b16 %v559, %v555
  %v592 = vpack.c.b16 %v560, %v556
  %v593 = vpack.c.b16 %v561, %v557
  %v594 = vpack.c.b16 %v562, %v558
  %627 = vmatprep.subr.bf16.mxu0 %v564
  %628 = vmatpush1.bf16.msra.mxu0 %v563
  %629 = vmatprep.subr.bf16.mxu0 %v568
  %630 = vmatpush1.bf16.msra.mxu0 %v567
  %631 = vmatprep.subr.bf16.mxu0 %v572
  %632 = vmatpush1.bf16.msra.mxu0 %v571
  %633 = vmatprep.subr.bf16.mxu0 %v576
  %634 = vmatpush1.bf16.msra.mxu0 %v575
  %635 = vmatprep.subr.bf16.mxu0 %v580
  %636 = vmatpush1.bf16.msra.mxu0 %v579
  %637 = vmatprep.subr.bf16.mxu0 %v584
  %638 = vmatpush1.bf16.msra.mxu0 %v583
  %639 = vmatprep.subr.bf16.mxu0 %v588
  %640 = vmatpush1.bf16.msra.mxu0 %v587
  %641 = vmatprep.subr.bf16.mxu0 %v592
  %642 = vmatpush1.bf16.msra.mxu0 %v591
  %643 = vmatprep.subr.bf16.mxu0 0
  %644 = vmatpush1.bf16.msra.mxu0 0
  %645 = vmatprep.subr.bf16.mxu0 0
  %646 = vmatpush1.bf16.msra.mxu0 0
  %647 = vmatprep.subr.bf16.mxu0 0
  %648 = vmatpush1.bf16.msra.mxu0 0
  %649 = vmatprep.subr.bf16.mxu0 0
  %650 = vmatpush1.bf16.msra.mxu0 0
  %651 = vmatprep.subr.bf16.mxu0 0
  %652 = vmatpush1.bf16.msra.mxu0 0
  %653 = vmatprep.subr.bf16.mxu0 0
  %654 = vmatpush1.bf16.msra.mxu0 0
  %655 = vmatprep.subr.bf16.mxu0 0
  %656 = vmatpush1.bf16.msra.mxu0 0
  %657 = vmatprep.subr.bf16.mxu0 0
  %658 = vmatpush1.bf16.msra.mxu0 0
  %659 = vmatprep.mubr.bf16.mxu0 0
  %660 = vmatmul.mubr.bf16.gmra.mrb[0].mxu0 %v466
  %v661 = vpop.f32.mrb[0].mxu0
  %v662 = vadd.f32 0.0, %v661
  %v663 = vpop.f32.mrb[0].mxu0
  %v664 = vadd.f32 0.0, %v663
  %v665 = vpop.f32.mrb[0].mxu0
  %v666 = vpop.f32.mrb[0].mxu0
  %667 = vdwg.mxu0
  %668 = vmatprep.subr.bf16.mxu0 %v566
  %669 = vmatpush1.bf16.msra.mxu0 %v565
  %670 = vmatprep.subr.bf16.mxu0 %v570
  %671 = vmatpush1.bf16.msra.mxu0 %v569
  %672 = vmatprep.subr.bf16.mxu0 %v574
  %673 = vmatpush1.bf16.msra.mxu0 %v573
  %674 = vmatprep.subr.bf16.mxu0 %v578
  %675 = vmatpush1.bf16.msra.mxu0 %v577
  %676 = vmatprep.subr.bf16.mxu0 %v582
  %677 = vmatpush1.bf16.msra.mxu0 %v581
  %678 = vmatprep.subr.bf16.mxu0 %v586
  %679 = vmatpush1.bf16.msra.mxu0 %v585
  %680 = vmatprep.subr.bf16.mxu0 %v590
  %681 = vmatpush1.bf16.msra.mxu0 %v589
  %682 = vmatprep.subr.bf16.mxu0 %v594
  %683 = vmatpush1.bf16.msra.mxu0 %v593
  %684 = vmatprep.subr.bf16.mxu0 0
  %685 = vmatpush1.bf16.msra.mxu0 0
  %686 = vmatprep.subr.bf16.mxu0 0
  %687 = vmatpush1.bf16.msra.mxu0 0
  %688 = vmatprep.subr.bf16.mxu0 0
  %689 = vmatpush1.bf16.msra.mxu0 0
  %690 = vmatprep.subr.bf16.mxu0 0
  %691 = vmatpush1.bf16.msra.mxu0 0
  %692 = vmatprep.subr.bf16.mxu0 0
  %693 = vmatpush1.bf16.msra.mxu0 0
  %694 = vmatprep.subr.bf16.mxu0 0
  %695 = vmatpush1.bf16.msra.mxu0 0
  %696 = vmatprep.subr.bf16.mxu0 0
  %697 = vmatpush1.bf16.msra.mxu0 0
  %698 = vmatprep.subr.bf16.mxu0 0
  %699 = vmatpush1.bf16.msra.mxu0 0
  %700 = vmatprep.mubr.bf16.mxu0 0
  %701 = vmatmul.mubr.bf16.gmra.mrb[0].mxu0 %v466
  %v702 = vpop.f32.mrb[0].mxu0
  %v703 = vadd.f32 0.0, %v702
  %v704 = vpop.f32.mrb[0].mxu0
  %v705 = vadd.f32 0.0, %v704
  %v706 = vpop.f32.mrb[0].mxu0
  %v707 = vpop.f32.mrb[0].mxu0
  %708 = vdwg.mxu0
  %v709 = vadd.f32 %v462, %v662
  %v710 = vadd.f32 %v463, %v664
  %v711 = vadd.f32 %v464, %v703
  %v712 = vadd.f32 %v465, %v705
  %v713 = vmul.f32 %v709, 0.5
  %v714 = vtanh.pop %v713
  %v715 = vmul.f32 %v714, 0.5
  %v716 = vadd.f32 %v715, 0.5
  %v717 = vmul.f32 %v710, 0.5
  %v718 = vtanh.pop %v717
  %v719 = vmul.f32 %v718, 0.5
  %v720 = vadd.f32 %v719, 0.5
  %v721 = vtanh.pop %v711
  %v722 = vmul.f32 %v712, 0.5
  %v723 = vtanh.pop %v722
  %v724 = vmul.f32 %v723, 0.5
  %v725 = vadd.f32 %v724, 0.5
  %v726 = vmul.f32 %v720, %v461
  %v727 = vmul.f32 %v716, %v721
  %v728 = vadd.f32 %v726, %v727
  %v729 = vtanh.pop %v728
  %v730 = vmul.f32 %v725, %v729
  %731 = vst [vmem:[%s4] sm:$0xff] %v730
  %s732 = scalar_lea.vmem [#allocation2], 32
  %v733 = vld [vmem:[%s732] sm:$0xff]
  %v734 = vld [vmem:[%s732 + $0x8] sm:$0xff]
  %v735 = vld [vmem:[%s732 + $0x10] sm:$0xff]
  %v736 = vld [vmem:[%s732 + $0x18] sm:$0xff]
  %v737 = vpack.c.bf16 %v730, %v730
  %738 = vmatprep.subr.bf16.mxu0 %v564
  %739 = vmatpush1.bf16.msra.mxu0 %v563
  %740 = vmatprep.subr.bf16.mxu0 %v568
  %741 = vmatpush1.bf16.msra.mxu0 %v567
  %742 = vmatprep.subr.bf16.mxu0 %v572
  %743 = vmatpush1.bf16.msra.mxu0 %v571
  %744 = vmatprep.subr.bf16.mxu0 %v576
  %745 = vmatpush1.bf16.msra.mxu0 %v575
  %746 = vmatprep.subr.bf16.mxu0 %v580
  %747 = vmatpush1.bf16.msra.mxu0 %v579
  %748 = vmatprep.subr.bf16.mxu0 %v584
  %749 = vmatpush1.bf16.msra.mxu0 %v583
  %750 = vmatprep.subr.bf16.mxu0 %v588
  %751 = vmatpush1.bf16.msra.mxu0 %v587
  %752 = vmatprep.subr.bf16.mxu0 %v592
  %753 = vmatpush1.bf16.msra.mxu0 %v591
  %754 = vmatprep.subr.bf16.mxu0 0
  %755 = vmatpush1.bf16.msra.mxu0 0
  %756 = vmatprep.subr.bf16.mxu0 0
  %757 = vmatpush1.bf16.msra.mxu0 0
  %758 = vmatprep.subr.bf16.mxu0 0
  %759 = vmatpush1.bf16.msra.mxu0 0
  %760 = vmatprep.subr.bf16.mxu0 0
  %761 = vmatpush1.bf16.msra.mxu0 0
  %762 = vmatprep.subr.bf16.mxu0 0
  %763 = vmatpush1.bf16.msra.mxu0 0
  %764 = vmatprep.subr.bf16.mxu0 0
  %765 = vmatpush1.bf16.msra.mxu0 0
  %766 = vmatprep.subr.bf16.mxu0 0
  %767 = vmatpush1.bf16.msra.mxu0 0
  %768 = vmatprep.subr.bf16.mxu0 0
  %769 = vmatpush1.bf16.msra.mxu0 0
  %770 = vmatprep.mubr.bf16.mxu0 0
  %771 = vmatmul.mubr.bf16.gmra.mrb[0].mxu0 %v737
  %v772 = vpop.f32.mrb[0].mxu0
  %v773 = vadd.f32 0.0, %v772
  %v774 = vpop.f32.mrb[0].mxu0
  %v775 = vadd.f32 0.0, %v774
  %v776 = vpop.f32.mrb[0].mxu0
  %v777 = vpop.f32.mrb[0].mxu0
  %778 = vdwg.mxu0
  %779 = vmatprep.subr.bf16.mxu0 %v566
  %780 = vmatpush1.bf16.msra.mxu0 %v565
  %781 = vmatprep.subr.bf16.mxu0 %v570
  %782 = vmatpush1.bf16.msra.mxu0 %v569
  %783 = vmatprep.subr.bf16.mxu0 %v574
  %784 = vmatpush1.bf16.msra.mxu0 %v573
  %785 = vmatprep.subr.bf16.mxu0 %v578
  %786 = vmatpush1.bf16.msra.mxu0 %v577
  %787 = vmatprep.subr.bf16.mxu0 %v582
  %788 = vmatpush1.bf16.msra.mxu0 %v581
  %789 = vmatprep.subr.bf16.mxu0 %v586
  %790 = vmatpush1.bf16.msra.mxu0 %v585
  %791 = vmatprep.subr.bf16.mxu0 %v590
  %792 = vmatpush1.bf16.msra.mxu0 %v589
  %793 = vmatprep.subr.bf16.mxu0 %v594
  %794 = vmatpush1.bf16.msra.mxu0 %v593
  %795 = vmatprep.subr.bf16.mxu0 0
  %796 = vmatpush1.bf16.msra.mxu0 0
  %797 = vmatprep.subr.bf16.mxu0 0
  %798 = vmatpush1.bf16.msra.mxu0 0
  %799 = vmatprep.subr.bf16.mxu0 0
  %800 = vmatpush1.bf16.msra.mxu0 0
  %801 = vmatprep.subr.bf16.mxu0 0
  %802 = vmatpush1.bf16.msra.mxu0 0
  %803 = vmatprep.subr.bf16.mxu0 0
  %804 = vmatpush1.bf16.msra.mxu0 0
  %805 = vmatprep.subr.bf16.mxu0 0
  %806 = vmatpush1.bf16.msra.mxu0 0
  %807 = vmatprep.subr.bf16.mxu0 0
  %808 = vmatpush1.bf16.msra.mxu0 0
  %809 = vmatprep.subr.bf16.mxu0 0
  %810 = vmatpush1.bf16.msra.mxu0 0
  %811 = vmatprep.mubr.bf16.mxu0 0
  %812 = vmatmul.mubr.bf16.gmra.mrb[0].mxu0 %v737
  %v813 = vpop.f32.mrb[0].mxu0
  %v814 = vadd.f32 0.0, %v813
  %v815 = vpop.f32.mrb[0].mxu0
  %v816 = vadd.f32 0.0, %v815
  %v817 = vpop.f32.mrb[0].mxu0
  %v818 = vpop.f32.mrb[0].mxu0
  %819 = vdwg.mxu0
  %v820 = vadd.f32 %v733, %v773
  %v821 = vadd.f32 %v734, %v775
  %v822 = vadd.f32 %v735, %v814
  %v823 = vadd.f32 %v736, %v816
  %v824 = vmul.f32 %v820, 0.5
  %v825 = vtanh.pop %v824
  %v826 = vmul.f32 %v825, 0.5
  %v827 = vadd.f32 %v826, 0.5
  %v828 = vmul.f32 %v821, 0.5
  %v829 = vtanh.pop %v828
  %v830 = vmul.f32 %v829, 0.5
  %v831 = vadd.f32 %v830, 0.5
  %v832 = vtanh.pop %v822
  %v833 = vmul.f32 %v823, 0.5
  %v834 = vtanh.pop %v833
  %v835 = vmul.f32 %v834, 0.5
  %v836 = vadd.f32 %v835, 0.5
  %v837 = vmul.f32 %v831, %v728
  %v838 = vmul.f32 %v827, %v832
  %v839 = vadd.f32 %v837, %v838
  %v840 = vtanh.pop %v839
  %v841 = vmul.f32 %v836, %v840
  %s842 = scalar_lea.vmem %s4, 8
  %843 = vst [vmem:[%s842] sm:$0xff] %v841
  %s844 = scalar_lea.vmem [#allocation2], 64
  %v845 = vld [vmem:[%s844] sm:$0xff]
  %v846 = vld [vmem:[%s844 + $0x8] sm:$0xff]
  %v847 = vld [vmem:[%s844 + $0x10] sm:$0xff]
  %v848 = vld [vmem:[%s844 + $0x18] sm:$0xff]
  %v849 = vpack.c.bf16 %v841, %v841
  %850 = vmatprep.subr.bf16.mxu0 %v564
  %851 = vmatpush1.bf16.msra.mxu0 %v563
  %852 = vmatprep.subr.bf16.mxu0 %v568
  %853 = vmatpush1.bf16.msra.mxu0 %v567
  %854 = vmatprep.subr.bf16.mxu0 %v572
  %855 = vmatpush1.bf16.msra.mxu0 %v571
  %856 = vmatprep.subr.bf16.mxu0 %v576
  %857 = vmatpush1.bf16.msra.mxu0 %v575
  %858 = vmatprep.subr.bf16.mxu0 %v580
  %859 = vmatpush1.bf16.msra.mxu0 %v579
  %860 = vmatprep.subr.bf16.mxu0 %v584
  %861 = vmatpush1.bf16.msra.mxu0 %v583
  %862 = vmatprep.subr.bf16.mxu0 %v588
  %863 = vmatpush1.bf16.msra.mxu0 %v587
  %864 = vmatprep.subr.bf16.mxu0 %v592
  %865 = vmatpush1.bf16.msra.mxu0 %v591
  %866 = vmatprep.subr.bf16.mxu0 0
  %867 = vmatpush1.bf16.msra.mxu0 0
  %868 = vmatprep.subr.bf16.mxu0 0
  %869 = vmatpush1.bf16.msra.mxu0 0
  %870 = vmatprep.subr.bf16.mxu0 0
  %871 = vmatpush1.bf16.msra.mxu0 0
  %872 = vmatprep.subr.bf16.mxu0 0
  %873 = vmatpush1.bf16.msra.mxu0 0
  %874 = vmatprep.subr.bf16.mxu0 0
  %875 = vmatpush1.bf16.msra.mxu0 0
  %876 = vmatprep.subr.bf16.mxu0 0
  %877 = vmatpush1.bf16.msra.mxu0 0
  %878 = vmatprep.subr.bf16.mxu0 0
  %879 = vmatpush1.bf16.msra.mxu0 0
  %880 = vmatprep.subr.bf16.mxu0 0
  %881 = vmatpush1.bf16.msra.mxu0 0
  %882 = vmatprep.mubr.bf16.mxu0 0
  %883 = vmatmul.mubr.bf16.gmra.mrb[0].mxu0 %v849
  %v884 = vpop.f32.mrb[0].mxu0
  %v885 = vadd.f32 0.0, %v884
  %v886 = vpop.f32.mrb[0].mxu0
  %v887 = vadd.f32 0.0, %v886
  %v888 = vpop.f32.mrb[0].mxu0
  %v889 = vpop.f32.mrb[0].mxu0
  %890 = vdwg.mxu0
  %891 = vmatprep.subr.bf16.mxu0 %v566
  %892 = vmatpush1.bf16.msra.mxu0 %v565
  %893 = vmatprep.subr.bf16.mxu0 %v570
  %894 = vmatpush1.bf16.msra.mxu0 %v569
  %895 = vmatprep.subr.bf16.mxu0 %v574
  %896 = vmatpush1.bf16.msra.mxu0 %v573
  %897 = vmatprep.subr.bf16.mxu0 %v578
  %898 = vmatpush1.bf16.msra.mxu0 %v577
  %899 = vmatprep.subr.bf16.mxu0 %v582
  %900 = vmatpush1.bf16.msra.mxu0 %v581
  %901 = vmatprep.subr.bf16.mxu0 %v586
  %902 = vmatpush1.bf16.msra.mxu0 %v585
  %903 = vmatprep.subr.bf16.mxu0 %v590
  %904 = vmatpush1.bf16.msra.mxu0 %v589
  %905 = vmatprep.subr.bf16.mxu0 %v594
  %906 = vmatpush1.bf16.msra.mxu0 %v593
  %907 = vmatprep.subr.bf16.mxu0 0
  %908 = vmatpush1.bf16.msra.mxu0 0
  %909 = vmatprep.subr.bf16.mxu0 0
  %910 = vmatpush1.bf16.msra.mxu0 0
  %911 = vmatprep.subr.bf16.mxu0 0
  %912 = vmatpush1.bf16.msra.mxu0 0
  %913 = vmatprep.subr.bf16.mxu0 0
  %914 = vmatpush1.bf16.msra.mxu0 0
  %915 = vmatprep.subr.bf16.mxu0 0
  %916 = vmatpush1.bf16.msra.mxu0 0
  %917 = vmatprep.subr.bf16.mxu0 0
  %918 = vmatpush1.bf16.msra.mxu0 0
  %919 = vmatprep.subr.bf16.mxu0 0
  %920 = vmatpush1.bf16.msra.mxu0 0
  %921 = vmatprep.subr.bf16.mxu0 0
  %922 = vmatpush1.bf16.msra.mxu0 0
  %923 = vmatprep.mubr.bf16.mxu0 0
  %924 = vmatmul.mubr.bf16.gmra.mrb[0].mxu0 %v849
  %v925 = vpop.f32.mrb[0].mxu0
  %v926 = vadd.f32 0.0, %v925
  %v927 = vpop.f32.mrb[0].mxu0
  %v928 = vadd.f32 0.0, %v927
  %v929 = vpop.f32.mrb[0].mxu0
  %v930 = vpop.f32.mrb[0].mxu0
  %931 = vdwg.mxu0
  %v932 = vadd.f32 %v845, %v885
  %v933 = vadd.f32 %v846, %v887
  %v934 = vadd.f32 %v847, %v926
  %v935 = vadd.f32 %v848, %v928
  %v936 = vmul.f32 %v932, 0.5
  %v937 = vtanh.pop %v936
  %v938 = vmul.f32 %v937, 0.5
  %v939 = vadd.f32 %v938, 0.5
  %v940 = vmul.f32 %v933, 0.5
  %v941 = vtanh.pop %v940
  %v942 = vmul.f32 %v941, 0.5
  %v943 = vadd.f32 %v942, 0.5
  %v944 = vtanh.pop %v934
  %v945 = vmul.f32 %v935, 0.5
  %v946 = vtanh.pop %v945
  %v947 = vmul.f32 %v946, 0.5
  %v948 = vadd.f32 %v947, 0.5
  %v949 = vmul.f32 %v943, %v839
  %v950 = vmul.f32 %v939, %v944
  %v951 = vadd.f32 %v949, %v950
  %v952 = vtanh.pop %v951
  %v953 = vmul.f32 %v948, %v952
  %s954 = scalar_lea.vmem %s4, 16
  %955 = vst [vmem:[%s954] sm:$0xff] %v953
  %s956 = scalar_lea.vmem [#allocation2], 96
  %v957 = vld [vmem:[%s956] sm:$0xff]
  %v958 = vld [vmem:[%s956 + $0x8] sm:$0xff]
  %v959 = vld [vmem:[%s956 + $0x10] sm:$0xff]
  %v960 = vld [vmem:[%s956 + $0x18] sm:$0xff]
  %v961 = vpack.c.bf16 %v953, %v953
  %962 = vmatprep.subr.bf16.mxu0 %v564
  %963 = vmatpush1.bf16.msra.mxu0 %v563
  %964 = vmatprep.subr.bf16.mxu0 %v568
  %965 = vmatpush1.bf16.msra.mxu0 %v567
  %966 = vmatprep.subr.bf16.mxu0 %v572
  %967 = vmatpush1.bf16.msra.mxu0 %v571
  %968 = vmatprep.subr.bf16.mxu0 %v576
  %969 = vmatpush1.bf16.msra.mxu0 %v575
  %970 = vmatprep.subr.bf16.mxu0 %v580
  %971 = vmatpush1.bf16.msra.mxu0 %v579
  %972 = vmatprep.subr.bf16.mxu0 %v584
  %973 = vmatpush1.bf16.msra.mxu0 %v583
  %974 = vmatprep.subr.bf16.mxu0 %v588
  %975 = vmatpush1.bf16.msra.mxu0 %v587
  %976 = vmatprep.subr.bf16.mxu0 %v592
  %977 = vmatpush1.bf16.msra.mxu0 %v591
  %978 = vmatprep.subr.bf16.mxu0 0
  %979 = vmatpush1.bf16.msra.mxu0 0
  %980 = vmatprep.subr.bf16.mxu0 0
  %981 = vmatpush1.bf16.msra.mxu0 0
  %982 = vmatprep.subr.bf16.mxu0 0
  %983 = vmatpush1.bf16.msra.mxu0 0
  %984 = vmatprep.subr.bf16.mxu0 0
  %985 = vmatpush1.bf16.msra.mxu0 0
  %986 = vmatprep.subr.bf16.mxu0 0
  %987 = vmatpush1.bf16.msra.mxu0 0
  %988 = vmatprep.subr.bf16.mxu0 0
  %989 = vmatpush1.bf16.msra.mxu0 0
  %990 = vmatprep.subr.bf16.mxu0 0
  %991 = vmatpush1.bf16.msra.mxu0 0
  %992 = vmatprep.subr.bf16.mxu0 0
  %993 = vmatpush1.bf16.msra.mxu0 0
  %994 = vmatprep.mubr.bf16.mxu0 0
  %995 = vmatmul.mubr.bf16.gmra.mrb[0].mxu0 %v961
  %v996 = vpop.f32.mrb[0].mxu0
  %v997 = vadd.f32 0.0, %v996
  %v998 = vpop.f32.mrb[0].mxu0
  %v999 = vadd.f32 0.0, %v998
  %v1000 = vpop.f32.mrb[0].mxu0
  %v1001 = vpop.f32.mrb[0].mxu0
  %1002 = vdwg.mxu0
  %1003 = vmatprep.subr.bf16.mxu0 %v566
  %1004 = vmatpush1.bf16.msra.mxu0 %v565
  %1005 = vmatprep.subr.bf16.mxu0 %v570
  %1006 = vmatpush1.bf16.msra.mxu0 %v569
  %1007 = vmatprep.subr.bf16.mxu0 %v574
  %1008 = vmatpush1.bf16.msra.mxu0 %v573
  %1009 = vmatprep.subr.bf16.mxu0 %v578
  %1010 = vmatpush1.bf16.msra.mxu0 %v577
  %1011 = vmatprep.subr.bf16.mxu0 %v582
  %1012 = vmatpush1.bf16.msra.mxu0 %v581
  %1013 = vmatprep.subr.bf16.mxu0 %v586
  %1014 = vmatpush1.bf16.msra.mxu0 %v585
  %1015 = vmatprep.subr.bf16.mxu0 %v590
  %1016 = vmatpush1.bf16.msra.mxu0 %v589
  %1017 = vmatprep.subr.bf16.mxu0 %v594
  %1018 = vmatpush1.bf16.msra.mxu0 %v593
  %1019 = vmatprep.subr.bf16.mxu0 0
  %1020 = vmatpush1.bf16.msra.mxu0 0
  %1021 = vmatprep.subr.bf16.mxu0 0
  %1022 = vmatpush1.bf16.msra.mxu0 0
  %1023 = vmatprep.subr.bf16.mxu0 0
  %1024 = vmatpush1.bf16.msra.mxu0 0
  %1025 = vmatprep.subr.bf16.mxu0 0
  %1026 = vmatpush1.bf16.msra.mxu0 0
  %1027 = vmatprep.subr.bf16.mxu0 0
  %1028 = vmatpush1.bf16.msra.mxu0 0
  %1029 = vmatprep.subr.bf16.mxu0 0
  %1030 = vmatpush1.bf16.msra.mxu0 0
  %1031 = vmatprep.subr.bf16.mxu0 0
  %1032 = vmatpush1.bf16.msra.mxu0 0
  %1033 = vmatprep.subr.bf16.mxu0 0
  %1034 = vmatpush1.bf16.msra.mxu0 0
  %1035 = vmatprep.mubr.bf16.mxu0 0
  %1036 = vmatmul.mubr.bf16.gmra.mrb[0].mxu0 %v961
  %v1037 = vpop.f32.mrb[0].mxu0
  %v1038 = vadd.f32 0.0, %v1037
  %v1039 = vpop.f32.mrb[0].mxu0
  %v1040 = vadd.f32 0.0, %v1039
  %v1041 = vpop.f32.mrb[0].mxu0
  %v1042 = vpop.f32.mrb[0].mxu0
  %1043 = vdwg.mxu0
  %v1044 = vadd.f32 %v957, %v997
  %v1045 = vadd.f32 %v958, %v999
  %v1046 = vadd.f32 %v959, %v1038
  %v1047 = vadd.f32 %v960, %v1040
  %v1048 = vmul.f32 %v1044, 0.5
  %v1049 = vtanh.pop %v1048
  %v1050 = vmul.f32 %v1049, 0.5
  %v1051 = vadd.f32 %v1050, 0.5
  %v1052 = vmul.f32 %v1045, 0.5
  %v1053 = vtanh.pop %v1052
  %v1054 = vmul.f32 %v1053, 0.5
  %v1055 = vadd.f32 %v1054, 0.5
  %v1056 = vtanh.pop %v1046
  %v1057 = vmul.f32 %v1047, 0.5
  %v1058 = vtanh.pop %v1057
  %v1059 = vmul.f32 %v1058, 0.5
  %v1060 = vadd.f32 %v1059, 0.5
  %v1061 = vmul.f32 %v1055, %v951
  %v1062 = vmul.f32 %v1051, %v1056
  %v1063 = vadd.f32 %v1061, %v1062
  %v1064 = vtanh.pop %v1063
  %v1065 = vmul.f32 %v1060, %v1064
  %s1066 = scalar_lea.vmem %s4, 24
  %1067 = vst [vmem:[%s1066] sm:$0xff] %v1065
  %s1068 = scalar_lea.vmem [#allocation2], 128
  %v1069 = vld [vmem:[%s1068] sm:$0xff]
  %v1070 = vld [vmem:[%s1068 + $0x8] sm:$0xff]
  %v1071 = vld [vmem:[%s1068 + $0x10] sm:$0xff]
  %v1072 = vld [vmem:[%s1068 + $0x18] sm:$0xff]
  %v1073 = vpack.c.bf16 %v1065, %v1065
  %1074 = vmatprep.subr.bf16.mxu0 %v564
  %1075 = vmatpush1.bf16.msra.mxu0 %v563
  %1076 = vmatprep.subr.bf16.mxu0 %v568
  %1077 = vmatpush1.bf16.msra.mxu0 %v567
  %1078 = vmatprep.subr.bf16.mxu0 %v572
  %1079 = vmatpush1.bf16.msra.mxu0 %v571
  %1080 = vmatprep.subr.bf16.mxu0 %v576
  %1081 = vmatpush1.bf16.msra.mxu0 %v575
  %1082 = vmatprep.subr.bf16.mxu0 %v580
  %1083 = vmatpush1.bf16.msra.mxu0 %v579
  %1084 = vmatprep.subr.bf16.mxu0 %v584
  %1085 = vmatpush1.bf16.msra.mxu0 %v583
  %1086 = vmatprep.subr.bf16.mxu0 %v588
  %1087 = vmatpush1.bf16.msra.mxu0 %v587
  %1088 = vmatprep.subr.bf16.mxu0 %v592
  %1089 = vmatpush1.bf16.msra.mxu0 %v591
  %1090 = vmatprep.subr.bf16.mxu0 0
  %1091 = vmatpush1.bf16.msra.mxu0 0
  %1092 = vmatprep.subr.bf16.mxu0 0
  %1093 = vmatpush1.bf16.msra.mxu0 0
  %1094 = vmatprep.subr.bf16.mxu0 0
  %1095 = vmatpush1.bf16.msra.mxu0 0
  %1096 = vmatprep.subr.bf16.mxu0 0
  %1097 = vmatpush1.bf16.msra.mxu0 0
  %1098 = vmatprep.subr.bf16.mxu0 0
  %1099 = vmatpush1.bf16.msra.mxu0 0
  %1100 = vmatprep.subr.bf16.mxu0 0
  %1101 = vmatpush1.bf16.msra.mxu0 0
  %1102 = vmatprep.subr.bf16.mxu0 0
  %1103 = vmatpush1.bf16.msra.mxu0 0
  %1104 = vmatprep.subr.bf16.mxu0 0
  %1105 = vmatpush1.bf16.msra.mxu0 0
  %1106 = vmatprep.mubr.bf16.mxu0 0
  %1107 = vmatmul.mubr.bf16.gmra.mrb[0].mxu0 %v1073
  %v1108 = vpop.f32.mrb[0].mxu0
  %v1109 = vadd.f32 0.0, %v1108
  %v1110 = vpop.f32.mrb[0].mxu0
  %v1111 = vadd.f32 0.0, %v1110
  %v1112 = vpop.f32.mrb[0].mxu0
  %v1113 = vpop.f32.mrb[0].mxu0
  %1114 = vdwg.mxu0
  %1115 = vmatprep.subr.bf16.mxu0 %v566
  %1116 = vmatpush1.bf16.msra.mxu0 %v565
  %1117 = vmatprep.subr.bf16.mxu0 %v570
  %1118 = vmatpush1.bf16.msra.mxu0 %v569
  %1119 = vmatprep.subr.bf16.mxu0 %v574
  %1120 = vmatpush1.bf16.msra.mxu0 %v573
  %1121 = vmatprep.subr.bf16.mxu0 %v578
  %1122 = vmatpush1.bf16.msra.mxu0 %v577
  %1123 = vmatprep.subr.bf16.mxu0 %v582
  %1124 = vmatpush1.bf16.msra.mxu0 %v581
  %1125 = vmatprep.subr.bf16.mxu0 %v586
  %1126 = vmatpush1.bf16.msra.mxu0 %v585
  %1127 = vmatprep.subr.bf16.mxu0 %v590
  %1128 = vmatpush1.bf16.msra.mxu0 %v589
  %1129 = vmatprep.subr.bf16.mxu0 %v594
  %1130 = vmatpush1.bf16.msra.mxu0 %v593
  %1131 = vmatprep.subr.bf16.mxu0 0
  %1132 = vmatpush1.bf16.msra.mxu0 0
  %1133 = vmatprep.subr.bf16.mxu0 0
  %1134 = vmatpush1.bf16.msra.mxu0 0
  %1135 = vmatprep.subr.bf16.mxu0 0
  %1136 = vmatpush1.bf16.msra.mxu0 0
  %1137 = vmatprep.subr.bf16.mxu0 0
  %1138 = vmatpush1.bf16.msra.mxu0 0
  %1139 = vmatprep.subr.bf16.mxu0 0
  %1140 = vmatpush1.bf16.msra.mxu0 0
  %1141 = vmatprep.subr.bf16.mxu0 0
  %1142 = vmatpush1.bf16.msra.mxu0 0
  %1143 = vmatprep.subr.bf16.mxu0 0
  %1144 = vmatpush1.bf16.msra.mxu0 0
  %1145 = vmatprep.subr.bf16.mxu0 0
  %1146 = vmatpush1.bf16.msra.mxu0 0
  %1147 = vmatprep.mubr.bf16.mxu0 0
  %1148 = vmatmul.mubr.bf16.gmra.mrb[0].mxu0 %v1073
  %v1149 = vpop.f32.mrb[0].mxu0
  %v1150 = vadd.f32 0.0, %v1149
  %v1151 = vpop.f32.mrb[0].mxu0
  %v1152 = vadd.f32 0.0, %v1151
  %v1153 = vpop.f32.mrb[0].mxu0
  %v1154 = vpop.f32.mrb[0].mxu0
  %1155 = vdwg.mxu0
  %v1156 = vadd.f32 %v1069, %v1109
  %v1157 = vadd.f32 %v1070, %v1111
  %v1158 = vadd.f32 %v1071, %v1150
  %v1159 = vadd.f32 %v1072, %v1152
  %v1160 = vmul.f32 %v1156, 0.5
  %v1161 = vtanh.pop %v1160
  %v1162 = vmul.f32 %v1161, 0.5
  %v1163 = vadd.f32 %v1162, 0.5
  %v1164 = vmul.f32 %v1157, 0.5
  %v1165 = vtanh.pop %v1164
  %v1166 = vmul.f32 %v1165, 0.5
  %v1167 = vadd.f32 %v1166, 0.5
  %v1168 = vtanh.pop %v1158
  %v1169 = vmul.f32 %v1159, 0.5
  %v1170 = vtanh.pop %v1169
  %v1171 = vmul.f32 %v1170, 0.5
  %v1172 = vadd.f32 %v1171, 0.5
  %v1173 = vmul.f32 %v1167, %v1063
  %v1174 = vmul.f32 %v1163, %v1168
  %v1175 = vadd.f32 %v1173, %v1174
  %v1176 = vtanh.pop %v1175
  %v1177 = vmul.f32 %v1172, %v1176
  %s1178 = scalar_lea.vmem %s4, 32
  %1179 = vst [vmem:[%s1178] sm:$0xff] %v1177
  %s1180 = scalar_lea.vmem [#allocation2], 160
  %v1181 = vld [vmem:[%s1180] sm:$0xff]
  %v1182 = vld [vmem:[%s1180 + $0x8] sm:$0xff]
  %v1183 = vld [vmem:[%s1180 + $0x10] sm:$0xff]
  %v1184 = vld [vmem:[%s1180 + $0x18] sm:$0xff]
  %v1185 = vpack.c.bf16 %v1177, %v1177
  %1186 = vmatprep.subr.bf16.mxu0 %v564
  %1187 = vmatpush1.bf16.msra.mxu0 %v563
  %1188 = vmatprep.subr.bf16.mxu0 %v568
  %1189 = vmatpush1.bf16.msra.mxu0 %v567
  %1190 = vmatprep.subr.bf16.mxu0 %v572
  %1191 = vmatpush1.bf16.msra.mxu0 %v571
  %1192 = vmatprep.subr.bf16.mxu0 %v576
  %1193 = vmatpush1.bf16.msra.mxu0 %v575
  %1194 = vmatprep.subr.bf16.mxu0 %v580
  %1195 = vmatpush1.bf16.msra.mxu0 %v579
  %1196 = vmatprep.subr.bf16.mxu0 %v584
  %1197 = vmatpush1.bf16.msra.mxu0 %v583
  %1198 = vmatprep.subr.bf16.mxu0 %v588
  %1199 = vmatpush1.bf16.msra.mxu0 %v587
  %1200 = vmatprep.subr.bf16.mxu0 %v592
  %1201 = vmatpush1.bf16.msra.mxu0 %v591
  %1202 = vmatprep.subr.bf16.mxu0 0
  %1203 = vmatpush1.bf16.msra.mxu0 0
  %1204 = vmatprep.subr.bf16.mxu0 0
  %1205 = vmatpush1.bf16.msra.mxu0 0
  %1206 = vmatprep.subr.bf16.mxu0 0
  %1207 = vmatpush1.bf16.msra.mxu0 0
  %1208 = vmatprep.subr.bf16.mxu0 0
  %1209 = vmatpush1.bf16.msra.mxu0 0
  %1210 = vmatprep.subr.bf16.mxu0 0
  %1211 = vmatpush1.bf16.msra.mxu0 0
  %1212 = vmatprep.subr.bf16.mxu0 0
  %1213 = vmatpush1.bf16.msra.mxu0 0
  %1214 = vmatprep.subr.bf16.mxu0 0
  %1215 = vmatpush1.bf16.msra.mxu0 0
  %1216 = vmatprep.subr.bf16.mxu0 0
  %1217 = vmatpush1.bf16.msra.mxu0 0
  %1218 = vmatprep.mubr.bf16.mxu0 0
  %1219 = vmatmul.mubr.bf16.gmra.mrb[0].mxu0 %v1185
  %v1220 = vpop.f32.mrb[0].mxu0
  %v1221 = vadd.f32 0.0, %v1220
  %v1222 = vpop.f32.mrb[0].mxu0
  %v1223 = vadd.f32 0.0, %v1222
  %v1224 = vpop.f32.mrb[0].mxu0
  %v1225 = vpop.f32.mrb[0].mxu0
  %1226 = vdwg.mxu0
  %1227 = vmatprep.subr.bf16.mxu0 %v566
  %1228 = vmatpush1.bf16.msra.mxu0 %v565
  %1229 = vmatprep.subr.bf16.mxu0 %v570
  %1230 = vmatpush1.bf16.msra.mxu0 %v569
  %1231 = vmatprep.subr.bf16.mxu0 %v574
  %1232 = vmatpush1.bf16.msra.mxu0 %v573
  %1233 = vmatprep.subr.bf16.mxu0 %v578
  %1234 = vmatpush1.bf16.msra.mxu0 %v577
  %1235 = vmatprep.subr.bf16.mxu0 %v582
  %1236 = vmatpush1.bf16.msra.mxu0 %v581
  %1237 = vmatprep.subr.bf16.mxu0 %v586
  %1238 = vmatpush1.bf16.msra.mxu0 %v585
  %1239 = vmatprep.subr.bf16.mxu0 %v590
  %1240 = vmatpush1.bf16.msra.mxu0 %v589
  %1241 = vmatprep.subr.bf16.mxu0 %v594
  %1242 = vmatpush1.bf16.msra.mxu0 %v593
  %1243 = vmatprep.subr.bf16.mxu0 0
  %1244 = vmatpush1.bf16.msra.mxu0 0
  %1245 = vmatprep.subr.bf16.mxu0 0
  %1246 = vmatpush1.bf16.msra.mxu0 0
  %1247 = vmatprep.subr.bf16.mxu0 0
  %1248 = vmatpush1.bf16.msra.mxu0 0
  %1249 = vmatprep.subr.bf16.mxu0 0
  %1250 = vmatpush1.bf16.msra.mxu0 0
  %1251 = vmatprep.subr.bf16.mxu0 0
  %1252 = vmatpush1.bf16.msra.mxu0 0
  %1253 = vmatprep.subr.bf16.mxu0 0
  %1254 = vmatpush1.bf16.msra.mxu0 0
  %1255 = vmatprep.subr.bf16.mxu0 0
  %1256 = vmatpush1.bf16.msra.mxu0 0
  %1257 = vmatprep.subr.bf16.mxu0 0
  %1258 = vmatpush1.bf16.msra.mxu0 0
  %1259 = vmatprep.mubr.bf16.mxu0 0
  %1260 = vmatmul.mubr.bf16.gmra.mrb[0].mxu0 %v1185
  %v1261 = vpop.f32.mrb[0].mxu0
  %v1262 = vadd.f32 0.0, %v1261
  %v1263 = vpop.f32.mrb[0].mxu0
  %v1264 = vadd.f32 0.0, %v1263
  %v1265 = vpop.f32.mrb[0].mxu0
  %v1266 = vpop.f32.mrb[0].mxu0
  %1267 = vdwg.mxu0
  %v1268 = vadd.f32 %v1181, %v1221
  %v1269 = vadd.f32 %v1182, %v1223
  %v1270 = vadd.f32 %v1183, %v1262
  %v1271 = vadd.f32 %v1184, %v1264
  %v1272 = vmul.f32 %v1268, 0.5
  %v1273 = vtanh.pop %v1272
  %v1274 = vmul.f32 %v1273, 0.5
  %v1275 = vadd.f32 %v1274, 0.5
  %v1276 = vmul.f32 %v1269, 0.5
  %v1277 = vtanh.pop %v1276
  %v1278 = vmul.f32 %v1277, 0.5
  %v1279 = vadd.f32 %v1278, 0.5
  %v1280 = vtanh.pop %v1270
  %v1281 = vmul.f32 %v1271, 0.5
  %v1282 = vtanh.pop %v1281
  %v1283 = vmul.f32 %v1282, 0.5
  %v1284 = vadd.f32 %v1283, 0.5
  %v1285 = vmul.f32 %v1279, %v1175
  %v1286 = vmul.f32 %v1275, %v1280
  %v1287 = vadd.f32 %v1285, %v1286
  %v1288 = vtanh.pop %v1287
  %v1289 = vmul.f32 %v1284, %v1288
  %s1290 = scalar_lea.vmem %s4, 40
  %1291 = vst [vmem:[%s1290] sm:$0xff] %v1289
  %s1292 = scalar_lea.vmem [#allocation2], 192
  %v1293 = vld [vmem:[%s1292] sm:$0xff]
  %v1294 = vld [vmem:[%s1292 + $0x8] sm:$0xff]
  %v1295 = vld [vmem:[%s1292 + $0x10] sm:$0xff]
  %v1296 = vld [vmem:[%s1292 + $0x18] sm:$0xff]
  %v1297 = vpack.c.bf16 %v1289, %v1289
  %1298 = vmatprep.subr.bf16.mxu0 %v564
  %1299 = vmatpush1.bf16.msra.mxu0 %v563
  %1300 = vmatprep.subr.bf16.mxu0 %v568
  %1301 = vmatpush1.bf16.msra.mxu0 %v567
  %1302 = vmatprep.subr.bf16.mxu0 %v572
  %1303 = vmatpush1.bf16.msra.mxu0 %v571
  %1304 = vmatprep.subr.bf16.mxu0 %v576
  %1305 = vmatpush1.bf16.msra.mxu0 %v575
  %1306 = vmatprep.subr.bf16.mxu0 %v580
  %1307 = vmatpush1.bf16.msra.mxu0 %v579
  %1308 = vmatprep.subr.bf16.mxu0 %v584
  %1309 = vmatpush1.bf16.msra.mxu0 %v583
  %1310 = vmatprep.subr.bf16.mxu0 %v588
  %1311 = vmatpush1.bf16.msra.mxu0 %v587
  %1312 = vmatprep.subr.bf16.mxu0 %v592
  %1313 = vmatpush1.bf16.msra.mxu0 %v591
  %1314 = vmatprep.subr.bf16.mxu0 0
  %1315 = vmatpush1.bf16.msra.mxu0 0
  %1316 = vmatprep.subr.bf16.mxu0 0
  %1317 = vmatpush1.bf16.msra.mxu0 0
  %1318 = vmatprep.subr.bf16.mxu0 0
  %1319 = vmatpush1.bf16.msra.mxu0 0
  %1320 = vmatprep.subr.bf16.mxu0 0
  %1321 = vmatpush1.bf16.msra.mxu0 0
  %1322 = vmatprep.subr.bf16.mxu0 0
  %1323 = vmatpush1.bf16.msra.mxu0 0
  %1324 = vmatprep.subr.bf16.mxu0 0
  %1325 = vmatpush1.bf16.msra.mxu0 0
  %1326 = vmatprep.subr.bf16.mxu0 0
  %1327 = vmatpush1.bf16.msra.mxu0 0
  %1328 = vmatprep.subr.bf16.mxu0 0
  %1329 = vmatpush1.bf16.msra.mxu0 0
  %1330 = vmatprep.mubr.bf16.mxu0 0
  %1331 = vmatmul.mubr.bf16.gmra.mrb[0].mxu0 %v1297
  %v1332 = vpop.f32.mrb[0].mxu0
  %v1333 = vadd.f32 0.0, %v1332
  %v1334 = vpop.f32.mrb[0].mxu0
  %v1335 = vadd.f32 0.0, %v1334
  %v1336 = vpop.f32.mrb[0].mxu0
  %v1337 = vpop.f32.mrb[0].mxu0
  %1338 = vdwg.mxu0
  %1339 = vmatprep.subr.bf16.mxu0 %v566
  %1340 = vmatpush1.bf16.msra.mxu0 %v565
  %1341 = vmatprep.subr.bf16.mxu0 %v570
  %1342 = vmatpush1.bf16.msra.mxu0 %v569
  %1343 = vmatprep.subr.bf16.mxu0 %v574
  %1344 = vmatpush1.bf16.msra.mxu0 %v573
  %1345 = vmatprep.subr.bf16.mxu0 %v578
  %1346 = vmatpush1.bf16.msra.mxu0 %v577
  %1347 = vmatprep.subr.bf16.mxu0 %v582
  %1348 = vmatpush1.bf16.msra.mxu0 %v581
  %1349 = vmatprep.subr.bf16.mxu0 %v586
  %1350 = vmatpush1.bf16.msra.mxu0 %v585
  %1351 = vmatprep.subr.bf16.mxu0 %v590
  %1352 = vmatpush1.bf16.msra.mxu0 %v589
  %1353 = vmatprep.subr.bf16.mxu0 %v594
  %1354 = vmatpush1.bf16.msra.mxu0 %v593
  %1355 = vmatprep.subr.bf16.mxu0 0
  %1356 = vmatpush1.bf16.msra.mxu0 0
  %1357 = vmatprep.subr.bf16.mxu0 0
  %1358 = vmatpush1.bf16.msra.mxu0 0
  %1359 = vmatprep.subr.bf16.mxu0 0
  %1360 = vmatpush1.bf16.msra.mxu0 0
  %1361 = vmatprep.subr.bf16.mxu0 0
  %1362 = vmatpush1.bf16.msra.mxu0 0
  %1363 = vmatprep.subr.bf16.mxu0 0
  %1364 = vmatpush1.bf16.msra.mxu0 0
  %1365 = vmatprep.subr.bf16.mxu0 0
  %1366 = vmatpush1.bf16.msra.mxu0 0
  %1367 = vmatprep.subr.bf16.mxu0 0
  %1368 = vmatpush1.bf16.msra.mxu0 0
  %1369 = vmatprep.subr.bf16.mxu0 0
  %1370 = vmatpush1.bf16.msra.mxu0 0
  %1371 = vmatprep.mubr.bf16.mxu0 0
  %1372 = vmatmul.mubr.bf16.gmra.mrb[0].mxu0 %v1297
  %v1373 = vpop.f32.mrb[0].mxu0
  %v1374 = vadd.f32 0.0, %v1373
  %v1375 = vpop.f32.mrb[0].mxu0
  %v1376 = vadd.f32 0.0, %v1375
  %v1377 = vpop.f32.mrb[0].mxu0
  %v1378 = vpop.f32.mrb[0].mxu0
  %1379 = vdwg.mxu0
  %v1380 = vadd.f32 %v1293, %v1333
  %v1381 = vadd.f32 %v1294, %v1335
  %v1382 = vadd.f32 %v1295, %v1374
  %v1383 = vadd.f32 %v1296, %v1376
  %v1384 = vmul.f32 %v1380, 0.5
  %v1385 = vtanh.pop %v1384
  %v1386 = vmul.f32 %v1385, 0.5
  %v1387 = vadd.f32 %v1386, 0.5
  %v1388 = vmul.f32 %v1381, 0.5
  %v1389 = vtanh.pop %v1388
  %v1390 = vmul.f32 %v1389, 0.5
  %v1391 = vadd.f32 %v1390, 0.5
  %v1392 = vtanh.pop %v1382
  %v1393 = vmul.f32 %v1383, 0.5
  %v1394 = vtanh.pop %v1393
  %v1395 = vmul.f32 %v1394, 0.5
  %v1396 = vadd.f32 %v1395, 0.5
  %v1397 = vmul.f32 %v1391, %v1287
  %v1398 = vmul.f32 %v1387, %v1392
  %v1399 = vadd.f32 %v1397, %v1398
  %v1400 = vtanh.pop %v1399
  %v1401 = vmul.f32 %v1396, %v1400
  %s1402 = scalar_lea.vmem %s4, 48
  %1403 = vst [vmem:[%s1402] sm:$0xff] %v1401
  %s1404 = scalar_lea.vmem [#allocation2], 224
  %v1405 = vld [vmem:[%s1404] sm:$0xff]
  %v1406 = vld [vmem:[%s1404 + $0x8] sm:$0xff]
  %v1407 = vld [vmem:[%s1404 + $0x10] sm:$0xff]
  %v1408 = vld [vmem:[%s1404 + $0x18] sm:$0xff]
  %v1409 = vpack.c.bf16 %v1401, %v1401
  %1410 = vmatprep.subr.bf16.mxu0 %v564
  %1411 = vmatpush1.bf16.msra.mxu0 %v563
  %1412 = vmatprep.subr.bf16.mxu0 %v568
  %1413 = vmatpush1.bf16.msra.mxu0 %v567
  %1414 = vmatprep.subr.bf16.mxu0 %v572
  %1415 = vmatpush1.bf16.msra.mxu0 %v571
  %1416 = vmatprep.subr.bf16.mxu0 %v576
  %1417 = vmatpush1.bf16.msra.mxu0 %v575
  %1418 = vmatprep.subr.bf16.mxu0 %v580
  %1419 = vmatpush1.bf16.msra.mxu0 %v579
  %1420 = vmatprep.subr.bf16.mxu0 %v584
  %1421 = vmatpush1.bf16.msra.mxu0 %v583
  %1422 = vmatprep.subr.bf16.mxu0 %v588
  %1423 = vmatpush1.bf16.msra.mxu0 %v587
  %1424 = vmatprep.subr.bf16.mxu0 %v592
  %1425 = vmatpush1.bf16.msra.mxu0 %v591
  %1426 = vmatprep.subr.bf16.mxu0 0
  %1427 = vmatpush1.bf16.msra.mxu0 0
  %1428 = vmatprep.subr.bf16.mxu0 0
  %1429 = vmatpush1.bf16.msra.mxu0 0
  %1430 = vmatprep.subr.bf16.mxu0 0
  %1431 = vmatpush1.bf16.msra.mxu0 0
  %1432 = vmatprep.subr.bf16.mxu0 0
  %1433 = vmatpush1.bf16.msra.mxu0 0
  %1434 = vmatprep.subr.bf16.mxu0 0
  %1435 = vmatpush1.bf16.msra.mxu0 0
  %1436 = vmatprep.subr.bf16.mxu0 0
  %1437 = vmatpush1.bf16.msra.mxu0 0
  %1438 = vmatprep.subr.bf16.mxu0 0
  %1439 = vmatpush1.bf16.msra.mxu0 0
  %1440 = vmatprep.subr.bf16.mxu0 0
  %1441 = vmatpush1.bf16.msra.mxu0 0
  %1442 = vmatprep.mubr.bf16.mxu0 0
  %1443 = vmatmul.mubr.bf16.gmra.mrb[0].mxu0 %v1409
  %v1444 = vpop.f32.mrb[0].mxu0
  %v1445 = vadd.f32 0.0, %v1444
  %v1446 = vpop.f32.mrb[0].mxu0
  %v1447 = vadd.f32 0.0, %v1446
  %v1448 = vpop.f32.mrb[0].mxu0
  %v1449 = vpop.f32.mrb[0].mxu0
  %1450 = vdwg.mxu0
  %1451 = vmatprep.subr.bf16.mxu0 %v566
  %1452 = vmatpush1.bf16.msra.mxu0 %v565
  %1453 = vmatprep.subr.bf16.mxu0 %v570
  %1454 = vmatpush1.bf16.msra.mxu0 %v569
  %1455 = vmatprep.subr.bf16.mxu0 %v574
  %1456 = vmatpush1.bf16.msra.mxu0 %v573
  %1457 = vmatprep.subr.bf16.mxu0 %v578
  %1458 = vmatpush1.bf16.msra.mxu0 %v577
  %1459 = vmatprep.subr.bf16.mxu0 %v582
  %1460 = vmatpush1.bf16.msra.mxu0 %v581
  %1461 = vmatprep.subr.bf16.mxu0 %v586
  %1462 = vmatpush1.bf16.msra.mxu0 %v585
  %1463 = vmatprep.subr.bf16.mxu0 %v590
  %1464 = vmatpush1.bf16.msra.mxu0 %v589
  %1465 = vmatprep.subr.bf16.mxu0 %v594
  %1466 = vmatpush1.bf16.msra.mxu0 %v593
  %1467 = vmatprep.subr.bf16.mxu0 0
  %1468 = vmatpush1.bf16.msra.mxu0 0
  %1469 = vmatprep.subr.bf16.mxu0 0
  %1470 = vmatpush1.bf16.msra.mxu0 0
  %1471 = vmatprep.subr.bf16.mxu0 0
  %1472 = vmatpush1.bf16.msra.mxu0 0
  %1473 = vmatprep.subr.bf16.mxu0 0
  %1474 = vmatpush1.bf16.msra.mxu0 0
  %1475 = vmatprep.subr.bf16.mxu0 0
  %1476 = vmatpush1.bf16.msra.mxu0 0
  %1477 = vmatprep.subr.bf16.mxu0 0
  %1478 = vmatpush1.bf16.msra.mxu0 0
  %1479 = vmatprep.subr.bf16.mxu0 0
  %1480 = vmatpush1.bf16.msra.mxu0 0
  %1481 = vmatprep.subr.bf16.mxu0 0
  %1482 = vmatpush1.bf16.msra.mxu0 0
  %1483 = vmatprep.mubr.bf16.mxu0 0
  %1484 = vmatmul.mubr.bf16.gmra.mrb[0].mxu0 %v1409
  %v1485 = vpop.f32.mrb[0].mxu0
  %v1486 = vadd.f32 0.0, %v1485
  %v1487 = vpop.f32.mrb[0].mxu0
  %v1488 = vadd.f32 0.0, %v1487
  %v1489 = vpop.f32.mrb[0].mxu0
  %v1490 = vpop.f32.mrb[0].mxu0
  %1491 = vdwg.mxu0
  %v1492 = vadd.f32 %v1405, %v1445
  %v1493 = vadd.f32 %v1406, %v1447
  %v1494 = vadd.f32 %v1407, %v1486
  %v1495 = vadd.f32 %v1408, %v1488
  %v1496 = vmul.f32 %v1492, 0.5
  %v1497 = vtanh.pop %v1496
  %v1498 = vmul.f32 %v1497, 0.5
  %v1499 = vadd.f32 %v1498, 0.5
  %v1500 = vmul.f32 %v1493, 0.5
  %v1501 = vtanh.pop %v1500
  %v1502 = vmul.f32 %v1501, 0.5
  %v1503 = vadd.f32 %v1502, 0.5
  %v1504 = vtanh.pop %v1494
  %v1505 = vmul.f32 %v1495, 0.5
  %v1506 = vtanh.pop %v1505
  %v1507 = vmul.f32 %v1506, 0.5
  %v1508 = vadd.f32 %v1507, 0.5
  %v1509 = vmul.f32 %v1503, %v1399
  %v1510 = vmul.f32 %v1499, %v1504
  %v1511 = vadd.f32 %v1509, %v1510
  %v1512 = vtanh.pop %v1511
  %v1513 = vmul.f32 %v1508, %v1512
  %s1514 = scalar_lea.vmem %s4, 56
  %1515 = vst [vmem:[%s1514] sm:$0xff] %v1513
  %1516 = vst [vmem:[#allocation3] sm:$0xff] %v1513
  %1517 = vst [vmem:[#allocation4] sm:$0xff] %v1511
  // Predicated region
  $region22: #{encoder_forward.2} parent=0 // pred_check
    _
  $region23: #{encoder_forward.2} parent=0 // pred_check_branch
    %1519 = sbr.rel (0) target = $region25
  $region24: #{encoder_forward.2} parent=0 // pred_region
    _
  $region25: #{encoder_forward.2} parent=0 // pred_fallthru
    _
  // Predicated region
  $region26: #{encoder_forward.2} parent=0 // pred_check
    _
  $region27: #{encoder_forward.2} parent=0 // pred_check_branch
    %1521 = sbr.rel (0) target = $region29
  $region28: #{encoder_forward.2} parent=0 // pred_region
    _
  $region29: #{encoder_forward.2} parent=0 // pred_fallthru
    _

</llo_original>
